<compile_context>
chip_gen: v6e
topology: v6e:2x2x1
jax: 0.10.0
libtpu: 0.0.40
codegen_flags: <defaults>
</compile_context>

<pallas_src>
import functools

import jax
import jax.numpy as jnp
from jax.experimental import pallas as pl
from jax.experimental.pallas import tpu as pltpu

_BN_EPS = 1e-5
_VMEM_LIMIT = 48 * 1024 * 1024  # explicit cap with headroom for v7x's 64 MiB VMEM


# ------------------------------ helpers --------------------------------------

def _round_up(x, m):
    return (x + m - 1) // m * m


def _m_tiling(m, pref=256):
    """Row-tile size and padded M (single tile for small M, 256 otherwise)."""
    tm = pref if m >= pref else _round_up(m, 8)
    return tm, _round_up(m, tm)


def _div_tile(dim, pref):
    """Largest multiple of 128 <= pref that divides `dim` (dim % 128 == 0)."""
    t = min(pref, dim)
    while dim % t:
        t -= 128
    return t


def fold_bn(gamma, beta, mean, var, eps=_BN_EPS):
    scale = gamma / jnp.sqrt(var + eps)
    shift = beta - mean * scale
    return scale, shift


# ------------------------------ Pallas kernels --------------------------------

def _matmul_bn_kernel(x_ref, w_ref, shift_ref, o_ref, acc_ref, *, relu):
    """Tiled matmul with K-axis accumulation; epilogue = +shift (+ReLU)."""
    @pl.when(pl.program_id(2) == 0)
    def _init():
        acc_ref[...] = jnp.zeros_like(acc_ref)

    acc_ref[...] += jnp.dot(x_ref[...], w_ref[...],
                            preferred_element_type=jnp.float32)

    @pl.when(pl.program_id(2) == pl.num_programs(2) - 1)
    def _fin():
        out = acc_ref[...] + shift_ref[...]
        if relu:
            out = jnp.maximum(out, 0.0)
        o_ref[...] = out.astype(o_ref.dtype)


def matmul_bn(x, w, shift, *, relu, out_dtype, tm, tn, tk):
    M, K = x.shape
    N = w.shape[1]
    return pl.pallas_call(
        functools.partial(_matmul_bn_kernel, relu=relu),
        out_shape=jax.ShapeDtypeStruct((M, N), out_dtype),
        grid_spec=pltpu.PrefetchScalarGridSpec(
            num_scalar_prefetch=0,
            grid=(M // tm, N // tn, K // tk),
            in_specs=[
                pl.BlockSpec((tm, tk), lambda i, j, k: (i, k)),
                pl.BlockSpec((tk, tn), lambda i, j, k: (k, j)),
                pl.BlockSpec((1, tn), lambda i, j, k: (0, j)),
            ],
            out_specs=pl.BlockSpec((tm, tn), lambda i, j, k: (i, j)),
            scratch_shapes=[pltpu.VMEM((tm, tn), jnp.float32)],
        ),
        compiler_params=pltpu.CompilerParams(
            dimension_semantics=("parallel", "parallel", "arbitrary"),
            vmem_limit_bytes=_VMEM_LIMIT,
        ),
    )(x, w, shift)


def _conv3x3_kernel(x_ref, w_ref, shift_ref, o_ref, *, taps, wo, cin_p):
    """3x3 conv as 9 accumulated matmuls over a space-to-depth packed image.

    x_ref : (1, Hp, Wp, s*s*cin_p)  VMEM-resident per-image block (bf16)
    w_ref : (9, cin_p, cout_p)      BN-scale-folded weights (bf16)
    o_ref : (1, 1, wo, cout_p)      one output row per grid step
    """
    r = pl.program_id(1)
    cout_p = w_ref.shape[2]
    acc = jnp.zeros((wo, cout_p), jnp.float32)
    for t, (dr, dc, coff) in enumerate(taps):
        slab = x_ref[0, pl.ds(r + dr, 1), dc:dc + wo, coff:coff + cin_p]
        slab = slab.reshape(wo, cin_p)
        acc = acc + jnp.dot(slab, w_ref[t], preferred_element_type=jnp.float32)
    out = jnp.maximum(acc + shift_ref[...], 0.0)
    o_ref[0, 0] = out.astype(o_ref.dtype)


def conv3x3_bn_relu(x_s2d, w_mat, shift, *, ho, wo, taps, cin_p, out_dtype):
    n, Hp, Wp, CC = x_s2d.shape
    t9, cp, cout_p = w_mat.shape
    return pl.pallas_call(
        functools.partial(_conv3x3_kernel, taps=taps, wo=wo, cin_p=cin_p),
        out_shape=jax.ShapeDtypeStruct((n, ho, wo, cout_p), out_dtype),
        grid_spec=pltpu.PrefetchScalarGridSpec(
            num_scalar_prefetch=0,
            grid=(n, ho),
            in_specs=[
                pl.BlockSpec((1, Hp, Wp, CC), lambda b, r: (b, 0, 0, 0)),
                pl.BlockSpec((t9, cp, cout_p), lambda b, r: (0, 0, 0)),
                pl.BlockSpec((1, cout_p), lambda b, r: (0, 0)),
            ],
            out_specs=pl.BlockSpec((1, 1, wo, cout_p), lambda b, r: (b, r, 0, 0)),
        ),
        compiler_params=pltpu.CompilerParams(
            dimension_semantics=("parallel", "parallel"),
            vmem_limit_bytes=_VMEM_LIMIT,
        ),
    )(x_s2d, w_mat, shift)


def _dual_matmul_bn_relu_kernel(a_ref, w1_ref, b_ref, w2_ref, shift_ref, o_ref):
    """Fused stage-3: conv3 matmul + downsample-shortcut matmul + shifts + ReLU."""
    acc = jnp.dot(a_ref[...], w1_ref[...], preferred_element_type=jnp.float32)
    acc += jnp.dot(b_ref[...], w2_ref[...], preferred_element_type=jnp.float32)
    out = jnp.maximum(acc + shift_ref[...], 0.0)
    o_ref[...] = out.astype(o_ref.dtype)


def matmul2_bn_add_relu(a, w1, b, w2, shift, *, tm, tn):
    M, Ka = a.shape
    Kb = b.shape[1]
    N = w1.shape[1]
    return pl.pallas_call(
        _dual_matmul_bn_relu_kernel,
        out_shape=jax.ShapeDtypeStruct((M, N), jnp.float32),
        grid_spec=pltpu.PrefetchScalarGridSpec(
            num_scalar_prefetch=0,
            grid=(M // tm, N // tn),
            in_specs=[
                pl.BlockSpec((tm, Ka), lambda i, j: (i, 0)),
                pl.BlockSpec((Ka, tn), lambda i, j: (0, j)),
                pl.BlockSpec((tm, Kb), lambda i, j: (i, 0)),
                pl.BlockSpec((Kb, tn), lambda i, j: (0, j)),
                pl.BlockSpec((1, tn), lambda i, j: (0, j)),
            ],
            out_specs=pl.BlockSpec((tm, tn), lambda i, j: (i, j)),
        ),
        compiler_params=pltpu.CompilerParams(
            dimension_semantics=("parallel", "parallel"),
            vmem_limit_bytes=_VMEM_LIMIT,
        ),
    )(a, w1, b, w2, shift)


def _matmul_bn_res_relu_kernel(a_ref, w_ref, shift_ref, res_ref, o_ref):
    """Fused stage-3 (identity shortcut): matmul + shift + residual + ReLU."""
    acc = jnp.dot(a_ref[...], w_ref[...], preferred_element_type=jnp.float32)
    out = jnp.maximum(acc + shift_ref[...] + res_ref[...].astype(jnp.float32), 0.0)
    o_ref[...] = out.astype(o_ref.dtype)


def matmul_bn_res_relu(a, w, shift, res, *, tm, tn):
    M, K = a.shape
    N = w.shape[1]
    return pl.pallas_call(
        _matmul_bn_res_relu_kernel,
        out_shape=jax.ShapeDtypeStruct((M, N), jnp.float32),
        grid_spec=pltpu.PrefetchScalarGridSpec(
            num_scalar_prefetch=0,
            grid=(M // tm, N // tn),
            in_specs=[
                pl.BlockSpec((tm, K), lambda i, j: (i, 0)),
                pl.BlockSpec((K, tn), lambda i, j: (0, j)),
                pl.BlockSpec((1, tn), lambda i, j: (0, j)),
                pl.BlockSpec((tm, tn), lambda i, j: (i, j)),
            ],
            out_specs=pl.BlockSpec((tm, tn), lambda i, j: (i, j)),
        ),
        compiler_params=pltpu.CompilerParams(
            dimension_semantics=("parallel", "parallel"),
            vmem_limit_bytes=_VMEM_LIMIT,
        ),
    )(a, w, shift, res)


# ------------------------------ glue (plain JAX) ------------------------------
# TODO(synk): the NCHW<->NHWC transposes, channel padding and the one-shot
# space-to-depth repack below are layout plumbing done in plain JAX (one extra
# read+write of the activation), not fused into the Pallas kernels.

def _space_to_depth_pad(x_nhwc, stride, ho, wo):
    """Pad by 1 (conv pad) and repack by stride so every 3x3 tap becomes a
    contiguous (shift-by-0/1) window of a stride-1 layout."""
    n, h, w, c = x_nhwc.shape
    s = stride
    Hp, Wp = ho + 2, wo + 2
    Hs, Ws = s * Hp, s * Wp
    xp = jnp.pad(x_nhwc, ((0, 0), (1, Hs - h - 1), (1, Ws - w - 1), (0, 0)))
    xp = xp.reshape(n, Hp, s, Wp, s, c)
    xp = jnp.transpose(xp, (0, 1, 3, 2, 4, 5))
    return xp.reshape(n, Hp, Wp, s * s * c)


def _prep_w_1x1(wt, bn, kin_p, kout_p):
    """Fold BN scale into a 1x1-conv weight; return bf16 (kin_p, kout_p) + f32 shift."""
    scale, shift = fold_bn(*bn)
    wm = wt[:, :, 0, 0].T * scale[None, :]
    wm = jnp.pad(wm, ((0, kin_p - wm.shape[0]), (0, kout_p - wm.shape[1])))
    shift = jnp.pad(shift, (0, kout_p - shift.shape[0])).reshape(1, kout_p)
    return wm.astype(jnp.bfloat16), shift.astype(jnp.float32)


def bottleneck_forward(x_nchw, params, stride):
    """Pallas implementation of BottleneckIN.forward (inference-mode BN)."""
    x = jnp.transpose(x_nchw, (0, 2, 3, 1)).astype(jnp.float32)      # NHWC
    n, h, w, cin = x.shape
    planes = params["w1"].shape[0]
    cout = params["w3"].shape[0]
    s = stride

    cin_p = _round_up(cin, 128)
    planes_p = _round_up(planes, 128)
    cout_p = _round_up(cout, 128)
    x_p = jnp.pad(x, ((0, 0), (0, 0), (0, 0), (0, cin_p - cin)))     # f32, lane-padded

    w1m, shift1 = _prep_w_1x1(params["w1"], params["bn1"], cin_p, planes_p)
    w3m, shift3 = _prep_w_1x1(params["w3"], params["bn3"], planes_p, cout_p)

    # ---- stage 1: 1x1 conv -> BN -> ReLU (tiled bf16 matmul, f32 accum) ----
    M1 = n * h * w
    x1 = x_p.astype(jnp.bfloat16).reshape(M1, cin_p)
    tm1, M1p = _m_tiling(M1)
    if M1p != M1:
        x1 = jnp.pad(x1, ((0, M1p - M1), (0, 0)))
    out1 = matmul_bn(x1, w1m, shift1, relu=True, out_dtype=jnp.bfloat16,
                     tm=tm1, tn=_div_tile(planes_p, 256), tk=_div_tile(cin_p, 512))
    out1 = out1[:M1].reshape(n, h, w, planes_p)

    # ---- stage 2: 3x3 conv (stride s, pad 1) -> BN -> ReLU (in-kernel 9 taps) ----
    ho = (h - 1) // s + 1
    wo = (w - 1) // s + 1
    x_s2d = _space_to_depth_pad(out1, s, ho, wo)
    scale2, shift2v = fold_bn(*params["bn2"])
    w2 = jnp.transpose(params["w2"], (2, 3, 1, 0))                   # (3,3,in,out)
    w2 = (w2 * scale2[None, None, None, :]).reshape(9, planes, planes)
    w2 = jnp.pad(w2, ((0, 0), (0, planes_p - planes),
                      (0, planes_p - planes))).astype(jnp.bfloat16)
    shift2 = jnp.pad(shift2v, (0, planes_p - planes)).reshape(1, planes_p)
    shift2 = shift2.astype(jnp.float32)
    taps = tuple((dh // s, dw // s, ((dh % s) * s + (dw % s)) * planes_p)
                 for dh in range(3) for dw in range(3))
    out2 = conv3x3_bn_relu(x_s2d, w2, shift2, ho=ho, wo=wo, taps=taps,
                           cin_p=planes_p, out_dtype=jnp.bfloat16)   # (n,ho,wo,planes_p)

    # ---- stage 3: 1x1 conv -> BN3 -> (+ fused shortcut) -> ReLU ----
    M2 = n * ho * wo
    a = out2.reshape(M2, planes_p)
    tm3, M2p = _m_tiling(M2)
    if M2p != M2:
        a = jnp.pad(a, ((0, M2p - M2), (0, 0)))
    tn3 = _div_tile(cout_p, 256)

    has_downsample = (s != 1) or (cin != cout)
    if has_downsample:
        wsm, shift_s = _prep_w_1x1(params["ws"], params["bns"], cin_p, cout_p)
        xs = x_p[:, ::s, ::s, :].astype(jnp.bfloat16).reshape(M2, cin_p)
        if M2p != M2:
            xs = jnp.pad(xs, ((0, M2p - M2), (0, 0)))
        out3 = matmul2_bn_add_relu(a, w3m, xs, wsm, shift3 + shift_s,
                                   tm=tm3, tn=tn3)
    else:
        res = x_p.reshape(M2, cout_p)                                # cin_p == cout_p here
        if M2p != M2:
            res = jnp.pad(res, ((0, M2p - M2), (0, 0)))
        out3 = matmul_bn_res_relu(a, w3m, shift3, res, tm=tm3, tn=tn3)

    out3 = out3[:M2, :cout].reshape(n, ho, wo, cout)
    return jnp.transpose(out3, (0, 3, 1, 2))                         # NCHW


# ------------------------------ pure-JAX reference ----------------------------

def ref_forward(x, params, stride, has_downsample, eps=_BN_EPS):
    def conv(x, w, s=1, p=0):
        return jax.lax.conv_general_dilated(
            x, w, (s, s), [(p, p), (p, p)],
            dimension_numbers=("NCHW", "OIHW", "NCHW"))

    def bn(x, pp):
        g, b, m, v = pp
        return ((x - m[None, :, None, None]) /
                jnp.sqrt(v[None, :, None, None] + eps) *
                g[None, :, None, None] + b[None, :, None, None])

    out = jax.nn.relu(bn(conv(x, params["w1"]), params["bn1"]))
    out = jax.nn.relu(bn(conv(out, params["w2"], stride, 1), params["bn2"]))
    out = bn(conv(out, params["w3"]), params["bn3"])
    identity = bn(conv(x, params["ws"], stride), params["bns"]) if has_downsample else x
    return jax.nn.relu(out + identity)


# ------------------------------ main -------------------------------------------

def make_params(key, in_planes, planes, expansion=4):
    cout = expansion * planes
    ks = jax.random.split(key, 8)

    def bn_params(k, c):
        k1, k2, k3, k4 = jax.random.split(k, 4)
        gamma = 1.0 + 0.1 * jax.random.normal(k1, (c,), jnp.float32)
        beta = 0.1 * jax.random.normal(k2, (c,), jnp.float32)
        mean = 0.1 * jax.random.normal(k3, (c,), jnp.float32)
        var = jnp.abs(jax.random.normal(k4, (c,), jnp.float32)) + 0.5
        return (gamma, beta, mean, var)

    return {
        "w1": 0.3 * jax.random.normal(ks[0], (planes, in_planes, 1, 1), jnp.float32),
        "w2": 0.3 * jax.random.normal(ks[1], (planes, planes, 3, 3), jnp.float32),
        "w3": 0.3 * jax.random.normal(ks[2], (cout, planes, 1, 1), jnp.float32),
        "ws": 0.3 * jax.random.normal(ks[3], (cout, in_planes, 1, 1), jnp.float32),
        "bn1": bn_params(ks[4], planes),
        "bn2": bn_params(ks[5], planes),
        "bn3": bn_params(ks[6], cout),
        "bns": bn_params(ks[7], cout),
    }


if __name__ == "__main__":
    forward = jax.jit(bottleneck_forward, static_argnums=(2,))

    def run_case(case_key, batch, in_planes, planes, spatial, stride):
        k_x, k_p = jax.random.split(case_key)
        x = jax.random.normal(k_x, (batch, in_planes, spatial, spatial), jnp.float32)
        params = make_params(k_p, in_planes, planes)
        has_ds = (stride != 1) or (in_planes != 4 * planes)

        out = jax.block_until_ready(forward(x, params, stride))
        ref = jax.block_until_ready(ref_forward(x, params, stride, has_ds))

        ho = (spatial - 1) // stride + 1
        assert out.shape == (batch, 4 * planes, ho, ho), out.shape
        err = float(jnp.max(jnp.abs(out - ref)))
        # bf16 MXU inputs with f32 accumulation -> loosened tolerance vs f32 ref.
        assert jnp.allclose(out, ref, atol=7e-2, rtol=7e-2), err

    key = jax.random.PRNGKey(0)
    k1, k2 = jax.random.split(key)
    run_case(k1, 2, 4, 4, 16, 2)    # stride-2 block with downsample shortcut
    run_case(k2, 2, 16, 4, 8, 1)    # stride-1 block with identity shortcut
    print("KERNEL_OK")
</pallas_src>

<mosaic_0001>
module attributes {stable_mosaic.version = 11 : i64} {
  func.func @_matmul_bn_kernel(%arg0: i32, %arg1: i32, %arg2: i32, %arg3: memref<256x128xbf16, #tpu.memory_space<vmem>>, %arg4: memref<128x128xbf16, #tpu.memory_space<vmem>>, %arg5: memref<1x128xf32, #tpu.memory_space<vmem>>, %arg6: memref<256x128xbf16, #tpu.memory_space<vmem>>, %arg7: memref<256x128xf32, #tpu.memory_space<vmem>>) attributes {dimension_semantics = [#tpu.dimension_semantics<parallel>, #tpu.dimension_semantics<parallel>, #tpu.dimension_semantics<arbitrary>], iteration_bounds = array<i64: 2, 1, 1>, scalar_prefetch = 0 : i64, scratch_operands = 1 : i64, tpu.core_type = #tpu.core_type<tc>, window_params = [{transform_indices = @transform_0, window_bounds = array<i64: 256, 128>}, {transform_indices = @transform_1, window_bounds = array<i64: 128, 128>}, {transform_indices = @transform_2, window_bounds = array<i64: 1, 128>}, {transform_indices = @transform_3, window_bounds = array<i64: 256, 128>}]} {
    %c0_i32 = arith.constant 0 : i32
    %0 = arith.cmpi eq, %arg2, %c0_i32 : i32
    %1 = arith.extui %0 : i1 to i32
    %c0_i32_0 = arith.constant 0 : i32
    %2 = arith.cmpi ne, %1, %c0_i32_0 : i32
    scf.if %2 {
      %cst_10 = arith.constant 0.000000e+00 : f32
      %12 = vector.broadcast %cst_10 : f32 to vector<256x128xf32>
      %c0_11 = arith.constant 0 : index
      %c0_12 = arith.constant 0 : index
      %13 = vector.load %arg7[%c0_11, %c0_12] : memref<256x128xf32, #tpu.memory_space<vmem>>, vector<256x128xf32>
      tpu.vector_store %arg7[%c0_11, %c0_12], %12 {strides = array<i32>} : memref<256x128xf32, #tpu.memory_space<vmem>>, vector<256x128xf32>,
    } else {
    }
    %c0 = arith.constant 0 : index
    %c0_1 = arith.constant 0 : index
    %3 = vector.load %arg7[%c0, %c0_1] : memref<256x128xf32, #tpu.memory_space<vmem>>, vector<256x128xf32>
    %c0_2 = arith.constant 0 : index
    %c0_3 = arith.constant 0 : index
    %4 = vector.load %arg3[%c0_2, %c0_3] : memref<256x128xbf16, #tpu.memory_space<vmem>>, vector<256x128xbf16>
    %c0_4 = arith.constant 0 : index
    %c0_5 = arith.constant 0 : index
    %5 = vector.load %arg4[%c0_4, %c0_5] : memref<128x128xbf16, #tpu.memory_space<vmem>>, vector<128x128xbf16>
    %cst = arith.constant dense<0.000000e+00> : vector<256x128xf32>
    %6 = tpu.matmul %4, %5, %cst {dimension_numbers = #tpu.dot_dimension_numbers<[1], [0], [0], [1], [0, 0, 1, 1], [], []>} : vector<256x128xbf16>, vector<128x128xbf16>, vector<256x128xf32> -> vector<256x128xf32>
    %7 = arith.addf %3, %6 : vector<256x128xf32>
    %c0_6 = arith.constant 0 : index
    %c0_7 = arith.constant 0 : index
    %8 = vector.load %arg7[%c0_6, %c0_7] : memref<256x128xf32, #tpu.memory_space<vmem>>, vector<256x128xf32>
    tpu.vector_store %arg7[%c0_6, %c0_7], %7 {strides = array<i32>} : memref<256x128xf32, #tpu.memory_space<vmem>>, vector<256x128xf32>,
    %c0_i32_8 = arith.constant 0 : i32
    %9 = arith.cmpi eq, %arg2, %c0_i32_8 : i32
    %10 = arith.extui %9 : i1 to i32
    %c0_i32_9 = arith.constant 0 : i32
    %11 = arith.cmpi ne, %10, %c0_i32_9 : i32
    scf.if %11 {
      %c0_10 = arith.constant 0 : index
      %c0_11 = arith.constant 0 : index
      %12 = vector.load %arg7[%c0_10, %c0_11] : memref<256x128xf32, #tpu.memory_space<vmem>>, vector<256x128xf32>
      %c0_12 = arith.constant 0 : index
      %c0_13 = arith.constant 0 : index
      %13 = vector.load %arg5[%c0_12, %c0_13] : memref<1x128xf32, #tpu.memory_space<vmem>>, vector<1x128xf32>
      %14 = vector.broadcast %13 : vector<1x128xf32> to vector<256x128xf32>
      %15 = arith.addf %12, %14 : vector<256x128xf32>
      %cst_14 = arith.constant 0.000000e+00 : f32
      %16 = vector.broadcast %cst_14 : f32 to vector<256x128xf32>
      %17 = arith.maximumf %15, %16 : vector<256x128xf32>
      %18 = arith.truncf %17 : vector<256x128xf32> to vector<256x128xbf16>
      %c0_15 = arith.constant 0 : index
      %c0_16 = arith.constant 0 : index
      %19 = vector.load %arg6[%c0_15, %c0_16] : memref<256x128xbf16, #tpu.memory_space<vmem>>, vector<256x128xbf16>
      tpu.vector_store %arg6[%c0_15, %c0_16], %18 {strides = array<i32>} : memref<256x128xbf16, #tpu.memory_space<vmem>>, vector<256x128xbf16>,
    } else {
    }
    return
  }
  func.func @transform_0(%arg0: i32, %arg1: i32, %arg2: i32) -> (i32, i32) {
    %c0_i32 = arith.constant 0 : i32
    return %arg0, %arg2 : i32, i32
  }
  func.func @transform_1(%arg0: i32, %arg1: i32, %arg2: i32) -> (i32, i32) {
    %c0_i32 = arith.constant 0 : i32
    return %arg2, %arg1 : i32, i32
  }
  func.func @transform_2(%arg0: i32, %arg1: i32, %arg2: i32) -> (i32, i32) {
    %c0_i32 = arith.constant 0 : i32
    %c0_i32_0 = arith.constant 0 : i32
    return %c0_i32, %arg1 : i32, i32
  }
  func.func @transform_3(%arg0: i32, %arg1: i32, %arg2: i32) -> (i32, i32) {
    %c0_i32 = arith.constant 0 : i32
    return %arg0, %arg1 : i32, i32
  }
}

module attributes {stable_mosaic.version = 11 : i64} {
  func.func @_conv3x3_kernel(%arg0: i32, %arg1: i32, %arg2: memref<1x10x10x512xbf16, #tpu.memory_space<vmem>>, %arg3: memref<9x128x128xbf16, #tpu.memory_space<vmem>>, %arg4: memref<1x128xf32, #tpu.memory_space<vmem>>, %arg5: memref<1x1x8x128xbf16, #tpu.memory_space<vmem>>) attributes {dimension_semantics = [#tpu.dimension_semantics<parallel>, #tpu.dimension_semantics<parallel>], iteration_bounds = array<i64: 2, 8>, scalar_prefetch = 0 : i64, scratch_operands = 0 : i64, tpu.core_type = #tpu.core_type<tc>, window_params = [{transform_indices = @transform_0, window_bounds = array<i64: 1, 10, 10, 512>}, {pipeline_mode = #tpu.pipeline_mode<synchronous>, transform_indices = @transform_1, window_bounds = array<i64: 9, 128, 128>}, {pipeline_mode = #tpu.pipeline_mode<synchronous>, transform_indices = @transform_2, window_bounds = array<i64: 1, 128>}, {transform_indices = @transform_3, window_bounds = array<i64: 1, 1, 8, 128>}]} {
    %cst = arith.constant 0.000000e+00 : f32
    %0 = vector.broadcast %cst : f32 to vector<8x128xf32>
    %c0_i32 = arith.constant 0 : i32
    %1 = arith.addi %arg1, %c0_i32 : i32
    %c0 = arith.constant 0 : index
    %2 = arith.index_cast %1 : i32 to index
    %c0_0 = arith.constant 0 : index
    %c0_1 = arith.constant 0 : index
    %3 = vector.load %arg2[%c0, %2, %c0_0, %c0_1] : memref<1x10x10x512xbf16, #tpu.memory_space<vmem>>, vector<1x1x8x128xbf16>
    %4 = vector.shape_cast %3 : vector<1x1x8x128xbf16> to vector<1x8x128xbf16>
    %5 = vector.shape_cast %4 : vector<1x8x128xbf16> to vector<8x128xbf16>
    %c0_2 = arith.constant 0 : index
    %c0_3 = arith.constant 0 : index
    %c0_4 = arith.constant 0 : index
    %6 = vector.load %arg3[%c0_2, %c0_3, %c0_4] : memref<9x128x128xbf16, #tpu.memory_space<vmem>>, vector<1x128x128xbf16>
    %7 = vector.shape_cast %6 : vector<1x128x128xbf16> to vector<128x128xbf16>
    %cst_5 = arith.constant dense<0.000000e+00> : vector<8x128xf32>
    %8 = tpu.matmul %5, %7, %cst_5 {dimension_numbers = #tpu.dot_dimension_numbers<[1], [0], [0], [1], [0, 0, 1, 1], [], []>} : vector<8x128xbf16>, vector<128x128xbf16>, vector<8x128xf32> -> vector<8x128xf32>
    %9 = arith.addf %0, %8 : vector<8x128xf32>
    %c0_i32_6 = arith.constant 0 : i32
    %10 = arith.addi %arg1, %c0_i32_6 : i32
    %c0_7 = arith.constant 0 : index
    %11 = arith.index_cast %10 : i32 to index
    %c0_8 = arith.constant 0 : index
    %c128 = arith.constant 128 : index
    %12 = vector.load %arg2[%c0_7, %11, %c0_8, %c128] : memref<1x10x10x512xbf16, #tpu.memory_space<vmem>>, vector<1x1x8x128xbf16>
    %13 = vector.shape_cast %12 : vector<1x1x8x128xbf16> to vector<1x8x128xbf16>
    %14 = vector.shape_cast %13 : vector<1x8x128xbf16> to vector<8x128xbf16>
    %c1 = arith.constant 1 : index
    %c0_9 = arith.constant 0 : index
    %c0_10 = arith.constant 0 : index
    %15 = vector.load %arg3[%c1, %c0_9, %c0_10] : memref<9x128x128xbf16, #tpu.memory_space<vmem>>, vector<1x128x128xbf16>
    %16 = vector.shape_cast %15 : vector<1x128x128xbf16> to vector<128x128xbf16>
    %cst_11 = arith.constant dense<0.000000e+00> : vector<8x128xf32>
    %17 = tpu.matmul %14, %16, %cst_11 {dimension_numbers = #tpu.dot_dimension_numbers<[1], [0], [0], [1], [0, 0, 1, 1], [], []>} : vector<8x128xbf16>, vector<128x128xbf16>, vector<8x128xf32> -> vector<8x128xf32>
    %18 = arith.addf %9, %17 : vector<8x128xf32>
    %c0_i32_12 = arith.constant 0 : i32
    %19 = arith.addi %arg1, %c0_i32_12 : i32
    %c0_13 = arith.constant 0 : index
    %20 = arith.index_cast %19 : i32 to index
    %c1_14 = arith.constant 1 : index
    %c0_15 = arith.constant 0 : index
    %21 = vector.load %arg2[%c0_13, %20, %c1_14, %c0_15] : memref<1x10x10x512xbf16, #tpu.memory_space<vmem>>, vector<1x1x8x128xbf16>
    %22 = vector.shape_cast %21 : vector<1x1x8x128xbf16> to vector<1x8x128xbf16>
    %23 = vector.shape_cast %22 : vector<1x8x128xbf16> to vector<8x128xbf16>
    %c2 = arith.constant 2 : index
    %c0_16 = arith.constant 0 : index
    %c0_17 = arith.constant 0 : index
    %24 = vector.load %arg3[%c2, %c0_16, %c0_17] : memref<9x128x128xbf16, #tpu.memory_space<vmem>>, vector<1x128x128xbf16>
    %25 = vector.shape_cast %24 : vector<1x128x128xbf16> to vector<128x128xbf16>
    %cst_18 = arith.constant dense<0.000000e+00> : vector<8x128xf32>
    %26 = tpu.matmul %23, %25, %cst_18 {dimension_numbers = #tpu.dot_dimension_numbers<[1], [0], [0], [1], [0, 0, 1, 1], [], []>} : vector<8x128xbf16>, vector<128x128xbf16>, vector<8x128xf32> -> vector<8x128xf32>
    %27 = arith.addf %18, %26 : vector<8x128xf32>
    %c0_i32_19 = arith.constant 0 : i32
    %28 = arith.addi %arg1, %c0_i32_19 : i32
    %c0_20 = arith.constant 0 : index
    %29 = arith.index_cast %28 : i32 to index
    %c0_21 = arith.constant 0 : index
    %c256 = arith.constant 256 : index
    %30 = vector.load %arg2[%c0_20, %29, %c0_21, %c256] : memref<1x10x10x512xbf16, #tpu.memory_space<vmem>>, vector<1x1x8x128xbf16>
    %31 = vector.shape_cast %30 : vector<1x1x8x128xbf16> to vector<1x8x128xbf16>
    %32 = vector.shape_cast %31 : vector<1x8x128xbf16> to vector<8x128xbf16>
    %c3 = arith.constant 3 : index
    %c0_22 = arith.constant 0 : index
    %c0_23 = arith.constant 0 : index
    %33 = vector.load %arg3[%c3, %c0_22, %c0_23] : memref<9x128x128xbf16, #tpu.memory_space<vmem>>, vector<1x128x128xbf16>
    %34 = vector.shape_cast %33 : vector<1x128x128xbf16> to vector<128x128xbf16>
    %cst_24 = arith.constant dense<0.000000e+00> : vector<8x128xf32>
    %35 = tpu.matmul %32, %34, %cst_24 {dimension_numbers = #tpu.dot_dimension_numbers<[1], [0], [0], [1], [0, 0, 1, 1], [], []>} : vector<8x128xbf16>, vector<128x128xbf16>, vector<8x128xf32> -> vector<8x128xf32>
    %36 = arith.addf %27, %35 : vector<8x128xf32>
    %c0_i32_25 = arith.constant 0 : i32
    %37 = arith.addi %arg1, %c0_i32_25 : i32
    %c0_26 = arith.constant 0 : index
    %38 = arith.index_cast %37 : i32 to index
    %c0_27 = arith.constant 0 : index
    %c384 = arith.constant 384 : index
    %39 = vector.load %arg2[%c0_26, %38, %c0_27, %c384] : memref<1x10x10x512xbf16, #tpu.memory_space<vmem>>, vector<1x1x8x128xbf16>
    %40 = vector.shape_cast %39 : vector<1x1x8x128xbf16> to vector<1x8x128xbf16>
    %41 = vector.shape_cast %40 : vector<1x8x128xbf16> to vector<8x128xbf16>
    %c4 = arith.constant 4 : index
    %c0_28 = arith.constant 0 : index
    %c0_29 = arith.constant 0 : index
    %42 = vector.load %arg3[%c4, %c0_28, %c0_29] : memref<9x128x128xbf16, #tpu.memory_space<vmem>>, vector<1x128x128xbf16>
    %43 = vector.shape_cast %42 : vector<1x128x128xbf16> to vector<128x128xbf16>
    %cst_30 = arith.constant dense<0.000000e+00> : vector<8x128xf32>
    %44 = tpu.matmul %41, %43, %cst_30 {dimension_numbers = #tpu.dot_dimension_numbers<[1], [0], [0], [1], [0, 0, 1, 1], [], []>} : vector<8x128xbf16>, vector<128x128xbf16>, vector<8x128xf32> -> vector<8x128xf32>
    %45 = arith.addf %36, %44 : vector<8x128xf32>
    %c0_i32_31 = arith.constant 0 : i32
    %46 = arith.addi %arg1, %c0_i32_31 : i32
    %c0_32 = arith.constant 0 : index
    %47 = arith.index_cast %46 : i32 to index
    %c1_33 = arith.constant 1 : index
    %c256_34 = arith.constant 256 : index
    %48 = vector.load %arg2[%c0_32, %47, %c1_33, %c256_34] : memref<1x10x10x512xbf16, #tpu.memory_space<vmem>>, vector<1x1x8x128xbf16>
    %49 = vector.shape_cast %48 : vector<1x1x8x128xbf16> to vector<1x8x128xbf16>
    %50 = vector.shape_cast %49 : vector<1x8x128xbf16> to vector<8x128xbf16>
    %c5 = arith.constant 5 : index
    %c0_35 = arith.constant 0 : index
    %c0_36 = arith.constant 0 : index
    %51 = vector.load %arg3[%c5, %c0_35, %c0_36] : memref<9x128x128xbf16, #tpu.memory_space<vmem>>, vector<1x128x128xbf16>
    %52 = vector.shape_cast %51 : vector<1x128x128xbf16> to vector<128x128xbf16>
    %cst_37 = arith.constant dense<0.000000e+00> : vector<8x128xf32>
    %53 = tpu.matmul %50, %52, %cst_37 {dimension_numbers = #tpu.dot_dimension_numbers<[1], [0], [0], [1], [0, 0, 1, 1], [], []>} : vector<8x128xbf16>, vector<128x128xbf16>, vector<8x128xf32> -> vector<8x128xf32>
    %54 = arith.addf %45, %53 : vector<8x128xf32>
    %c1_i32 = arith.constant 1 : i32
    %55 = arith.addi %arg1, %c1_i32 : i32
    %c0_38 = arith.constant 0 : index
    %56 = arith.index_cast %55 : i32 to index
    %c0_39 = arith.constant 0 : index
    %c0_40 = arith.constant 0 : index
    %57 = vector.load %arg2[%c0_38, %56, %c0_39, %c0_40] : memref<1x10x10x512xbf16, #tpu.memory_space<vmem>>, vector<1x1x8x128xbf16>
    %58 = vector.shape_cast %57 : vector<1x1x8x128xbf16> to vector<1x8x128xbf16>
    %59 = vector.shape_cast %58 : vector<1x8x128xbf16> to vector<8x128xbf16>
    %c6 = arith.constant 6 : index
    %c0_41 = arith.constant 0 : index
    %c0_42 = arith.constant 0 : index
    %60 = vector.load %arg3[%c6, %c0_41, %c0_42] : memref<9x128x128xbf16, #tpu.memory_space<vmem>>, vector<1x128x128xbf16>
    %61 = vector.shape_cast %60 : vector<1x128x128xbf16> to vector<128x128xbf16>
    %cst_43 = arith.constant dense<0.000000e+00> : vector<8x128xf32>
    %62 = tpu.matmul %59, %61, %cst_43 {dimension_numbers = #tpu.dot_dimension_numbers<[1], [0], [0], [1], [0, 0, 1, 1], [], []>} : vector<8x128xbf16>, vector<128x128xbf16>, vector<8x128xf32> -> vector<8x128xf32>
    %63 = arith.addf %54, %62 : vector<8x128xf32>
    %c1_i32_44 = arith.constant 1 : i32
    %64 = arith.addi %arg1, %c1_i32_44 : i32
    %c0_45 = arith.constant 0 : index
    %65 = arith.index_cast %64 : i32 to index
    %c0_46 = arith.constant 0 : index
    %c128_47 = arith.constant 128 : index
    %66 = vector.load %arg2[%c0_45, %65, %c0_46, %c128_47] : memref<1x10x10x512xbf16, #tpu.memory_space<vmem>>, vector<1x1x8x128xbf16>
    %67 = vector.shape_cast %66 : vector<1x1x8x128xbf16> to vector<1x8x128xbf16>
    %68 = vector.shape_cast %67 : vector<1x8x128xbf16> to vector<8x128xbf16>
    %c7 = arith.constant 7 : index
    %c0_48 = arith.constant 0 : index
    %c0_49 = arith.constant 0 : index
    %69 = vector.load %arg3[%c7, %c0_48, %c0_49] : memref<9x128x128xbf16, #tpu.memory_space<vmem>>, vector<1x128x128xbf16>
    %70 = vector.shape_cast %69 : vector<1x128x128xbf16> to vector<128x128xbf16>
    %cst_50 = arith.constant dense<0.000000e+00> : vector<8x128xf32>
    %71 = tpu.matmul %68, %70, %cst_50 {dimension_numbers = #tpu.dot_dimension_numbers<[1], [0], [0], [1], [0, 0, 1, 1], [], []>} : vector<8x128xbf16>, vector<128x128xbf16>, vector<8x128xf32> -> vector<8x128xf32>
    %72 = arith.addf %63, %71 : vector<8x128xf32>
    %c1_i32_51 = arith.constant 1 : i32
    %73 = arith.addi %arg1, %c1_i32_51 : i32
    %c0_52 = arith.constant 0 : index
    %74 = arith.index_cast %73 : i32 to index
    %c1_53 = arith.constant 1 : index
    %c0_54 = arith.constant 0 : index
    %75 = vector.load %arg2[%c0_52, %74, %c1_53, %c0_54] : memref<1x10x10x512xbf16, #tpu.memory_space<vmem>>, vector<1x1x8x128xbf16>
    %76 = vector.shape_cast %75 : vector<1x1x8x128xbf16> to vector<1x8x128xbf16>
    %77 = vector.shape_cast %76 : vector<1x8x128xbf16> to vector<8x128xbf16>
    %c8 = arith.constant 8 : index
    %c0_55 = arith.constant 0 : index
    %c0_56 = arith.constant 0 : index
    %78 = vector.load %arg3[%c8, %c0_55, %c0_56] : memref<9x128x128xbf16, #tpu.memory_space<vmem>>, vector<1x128x128xbf16>
    %79 = vector.shape_cast %78 : vector<1x128x128xbf16> to vector<128x128xbf16>
    %cst_57 = arith.constant dense<0.000000e+00> : vector<8x128xf32>
    %80 = tpu.matmul %77, %79, %cst_57 {dimension_numbers = #tpu.dot_dimension_numbers<[1], [0], [0], [1], [0, 0, 1, 1], [], []>} : vector<8x128xbf16>, vector<128x128xbf16>, vector<8x128xf32> -> vector<8x128xf32>
    %81 = arith.addf %72, %80 : vector<8x128xf32>
    %c0_58 = arith.constant 0 : index
    %c0_59 = arith.constant 0 : index
    %82 = vector.load %arg4[%c0_58, %c0_59] : memref<1x128xf32, #tpu.memory_space<vmem>>, vector<1x128xf32>
    %83 = vector.broadcast %82 : vector<1x128xf32> to vector<8x128xf32>
    %84 = arith.addf %81, %83 : vector<8x128xf32>
    %cst_60 = arith.constant 0.000000e+00 : f32
    %85 = vector.broadcast %cst_60 : f32 to vector<8x128xf32>
    %86 = arith.maximumf %84, %85 : vector<8x128xf32>
    %87 = arith.truncf %86 : vector<8x128xf32> to vector<8x128xbf16>
    %c0_61 = arith.constant 0 : index
    %c0_62 = arith.constant 0 : index
    %c0_63 = arith.constant 0 : index
    %c0_64 = arith.constant 0 : index
    %88 = vector.load %arg5[%c0_61, %c0_62, %c0_63, %c0_64] : memref<1x1x8x128xbf16, #tpu.memory_space<vmem>>, vector<1x1x8x128xbf16>
    %89 = vector.shape_cast %88 : vector<1x1x8x128xbf16> to vector<8x128xbf16>
    %90 = vector.shape_cast %87 : vector<8x128xbf16> to vector<1x1x8x128xbf16>
    tpu.vector_store %arg5[%c0_61, %c0_62, %c0_63, %c0_64], %90 {strides = array<i32>} : memref<1x1x8x128xbf16, #tpu.memory_space<vmem>>, vector<1x1x8x128xbf16>,
    return
  }
  func.func @transform_0(%arg0: i32, %arg1: i32) -> (i32, i32, i32, i32) {
    %c0_i32 = arith.constant 0 : i32
    %c0_i32_0 = arith.constant 0 : i32
    %c0_i32_1 = arith.constant 0 : i32
    %c0_i32_2 = arith.constant 0 : i32
    return %arg0, %c0_i32, %c0_i32_0, %c0_i32_1 : i32, i32, i32, i32
  }
  func.func @transform_1(%arg0: i32, %arg1: i32) -> (i32, i32, i32) {
    %c0_i32 = arith.constant 0 : i32
    %c0_i32_0 = arith.constant 0 : i32
    %c0_i32_1 = arith.constant 0 : i32
    %c0_i32_2 = arith.constant 0 : i32
    return %c0_i32, %c0_i32_0, %c0_i32_1 : i32, i32, i32
  }
  func.func @transform_2(%arg0: i32, %arg1: i32) -> (i32, i32) {
    %c0_i32 = arith.constant 0 : i32
    %c0_i32_0 = arith.constant 0 : i32
    %c0_i32_1 = arith.constant 0 : i32
    return %c0_i32, %c0_i32_0 : i32, i32
  }
  func.func @transform_3(%arg0: i32, %arg1: i32) -> (i32, i32, i32, i32) {
    %c0_i32 = arith.constant 0 : i32
    %c0_i32_0 = arith.constant 0 : i32
    %c0_i32_1 = arith.constant 0 : i32
    return %arg0, %arg1, %c0_i32, %c0_i32_0 : i32, i32, i32, i32
  }
}

module attributes {stable_mosaic.version = 11 : i64} {
  func.func @_dual_matmul_bn_relu_kernel(%arg0: i32, %arg1: i32, %arg2: memref<128x128xbf16, #tpu.memory_space<vmem>>, %arg3: memref<128x128xbf16, #tpu.memory_space<vmem>>, %arg4: memref<128x128xbf16, #tpu.memory_space<vmem>>, %arg5: memref<128x128xbf16, #tpu.memory_space<vmem>>, %arg6: memref<1x128xf32, #tpu.memory_space<vmem>>, %arg7: memref<128x128xf32, #tpu.memory_space<vmem>>) attributes {dimension_semantics = [#tpu.dimension_semantics<parallel>, #tpu.dimension_semantics<parallel>], iteration_bounds = array<i64: 1, 1>, scalar_prefetch = 0 : i64, scratch_operands = 0 : i64, tpu.core_type = #tpu.core_type<tc>, window_params = [{transform_indices = @transform_0, window_bounds = array<i64: 128, 128>}, {transform_indices = @transform_1, window_bounds = array<i64: 128, 128>}, {transform_indices = @transform_2, window_bounds = array<i64: 128, 128>}, {transform_indices = @transform_3, window_bounds = array<i64: 128, 128>}, {transform_indices = @transform_4, window_bounds = array<i64: 1, 128>}, {transform_indices = @transform_5, window_bounds = array<i64: 128, 128>}]} {
    %c0 = arith.constant 0 : index
    %c0_0 = arith.constant 0 : index
    %0 = vector.load %arg2[%c0, %c0_0] : memref<128x128xbf16, #tpu.memory_space<vmem>>, vector<128x128xbf16>
    %c0_1 = arith.constant 0 : index
    %c0_2 = arith.constant 0 : index
    %1 = vector.load %arg3[%c0_1, %c0_2] : memref<128x128xbf16, #tpu.memory_space<vmem>>, vector<128x128xbf16>
    %cst = arith.constant dense<0.000000e+00> : vector<128x128xf32>
    %2 = tpu.matmul %0, %1, %cst {dimension_numbers = #tpu.dot_dimension_numbers<[1], [0], [0], [1], [0, 0, 1, 1], [], []>} : vector<128x128xbf16>, vector<128x128xbf16>, vector<128x128xf32> -> vector<128x128xf32>
    %c0_3 = arith.constant 0 : index
    %c0_4 = arith.constant 0 : index
    %3 = vector.load %arg4[%c0_3, %c0_4] : memref<128x128xbf16, #tpu.memory_space<vmem>>, vector<128x128xbf16>
    %c0_5 = arith.constant 0 : index
    %c0_6 = arith.constant 0 : index
    %4 = vector.load %arg5[%c0_5, %c0_6] : memref<128x128xbf16, #tpu.memory_space<vmem>>, vector<128x128xbf16>
    %cst_7 = arith.constant dense<0.000000e+00> : vector<128x128xf32>
    %5 = tpu.matmul %3, %4, %cst_7 {dimension_numbers = #tpu.dot_dimension_numbers<[1], [0], [0], [1], [0, 0, 1, 1], [], []>} : vector<128x128xbf16>, vector<128x128xbf16>, vector<128x128xf32> -> vector<128x128xf32>
    %6 = arith.addf %2, %5 : vector<128x128xf32>
    %c0_8 = arith.constant 0 : index
    %c0_9 = arith.constant 0 : index
    %7 = vector.load %arg6[%c0_8, %c0_9] : memref<1x128xf32, #tpu.memory_space<vmem>>, vector<1x128xf32>
    %8 = vector.broadcast %7 : vector<1x128xf32> to vector<128x128xf32>
    %9 = arith.addf %6, %8 : vector<128x128xf32>
    %cst_10 = arith.constant 0.000000e+00 : f32
    %10 = vector.broadcast %cst_10 : f32 to vector<128x128xf32>
    %11 = arith.maximumf %9, %10 : vector<128x128xf32>
    %c0_11 = arith.constant 0 : index
    %c0_12 = arith.constant 0 : index
    %12 = vector.load %arg7[%c0_11, %c0_12] : memref<128x128xf32, #tpu.memory_space<vmem>>, vector<128x128xf32>
    tpu.vector_store %arg7[%c0_11, %c0_12], %11 {strides = array<i32>} : memref<128x128xf32, #tpu.memory_space<vmem>>, vector<128x128xf32>,
    return
  }
  func.func @transform_0(%arg0: i32, %arg1: i32) -> (i32, i32) {
    %c0_i32 = arith.constant 0 : i32
    %c0_i32_0 = arith.constant 0 : i32
    return %arg0, %c0_i32 : i32, i32
  }
  func.func @transform_1(%arg0: i32, %arg1: i32) -> (i32, i32) {
    %c0_i32 = arith.constant 0 : i32
    %c0_i32_0 = arith.constant 0 : i32
    return %c0_i32, %arg1 : i32, i32
  }
  func.func @transform_2(%arg0: i32, %arg1: i32) -> (i32, i32) {
    %c0_i32 = arith.constant 0 : i32
    %c0_i32_0 = arith.constant 0 : i32
    return %arg0, %c0_i32 : i32, i32
  }
  func.func @transform_3(%arg0: i32, %arg1: i32) -> (i32, i32) {
    %c0_i32 = arith.constant 0 : i32
    %c0_i32_0 = arith.constant 0 : i32
    return %c0_i32, %arg1 : i32, i32
  }
  func.func @transform_4(%arg0: i32, %arg1: i32) -> (i32, i32) {
    %c0_i32 = arith.constant 0 : i32
    %c0_i32_0 = arith.constant 0 : i32
    return %c0_i32, %arg1 : i32, i32
  }
  func.func @transform_5(%arg0: i32, %arg1: i32) -> (i32, i32) {
    %c0_i32 = arith.constant 0 : i32
    return %arg0, %arg1 : i32, i32
  }
}

</mosaic_0001>

<llo_original>
// kernel: bottleneck_forward.3
$region0: #{bottleneck_forward.3}
  #allocation0 [shape = 'u32[]', space=smem, size = 0x4, offset = 0x4, fixed_abs, tag = 'smem constant byte address 0x4 - core index']
  #allocation1 [shape = 'u32[144,128]{1,0:T(1,128)}', space=vmem, size = 0x12000, scoped, tag = 'internal scratch']
  #allocation2 [shape = 'f32[256,128]{1,0:T(8,128)}', space=vmem, size = 0x20000, scoped, tag = 'scratch operand']
  %s0 = inlined_call_operand.vmem [shape: bf16[512,128], index: 0, kind: input, shape index: {}]
  %s1 = inlined_call_operand.vmem [shape: bf16[128,128], index: 1, kind: input, shape index: {}]
  %s2 = inlined_call_operand.vmem [shape: f32[1,128], index: 2, kind: input, shape index: {}]
  %s3 = inlined_call_operand.vmem [shape: bf16[512,128], index: 3, kind: output, shape index: {}]
  %s4 = sld [smem:[#allocation0]]
  $region53: #{bottleneck_forward.3} parent=0
    _
  %s6 = ssub.s32 1, %s4
  %s7 = scalar_select 0, %s6, %s4
  loop: start=0, step=1, limit=4
  $region2: #{bottleneck_forward.3} parent=0 // loop_pre_header
    _
  $region3: #{bottleneck_forward.3} parent=0 // loop_header
    %s9 = sphi 0, %s13
    %p10 = scmp.ge.s32.totalorder %s9, 4
    %s16 = sphi 0, %s35
    %s17 = sphi 0, %s31
    %s18 = sphi 0, %s27
    %s19 = sphi 0, %s16
    %s20 = sphi 0, %s17
    %s21 = sphi 0, %s18
    %s22 = sphi 0, %s19
    %s23 = sphi 0, %s20
    %s24 = sphi 0, %s21
    %s40 = sphi 0, %s42
    %s43 = sphi 0, %s40
    %s44 = sphi 0, %s43
    %s60 = sphi 0, %s44
    %s68 = sphi 0, %s70
    %s71 = sphi 0, %s68
    %s72 = sphi 0, %s71
    %s88 = sphi 0, %s72
    %s94 = sphi 0, %s96
    %s97 = sphi 0, %s94
    %s98 = sphi 0, %s97
    %s114 = sphi 0, %s98
    %s122 = sphi 0, %s124
    %s125 = sphi 0, %s122
    %s126 = sphi 0, %s125
    %s142 = sphi 0, %s126
  $region4: #{bottleneck_forward.3} parent=0 // loop_header_branch
    %12 = sbr.rel (%p10) target = $region8
  $region5: #{bottleneck_forward.3} parent=0 // loop_body
    %s14 = ssub.s32 %s9, 1
    %s15 = ssub.s32 %s9, 2
    %s25 = sadd.s32 1, %s18
    %p26 = scmp.ge.s32.totalorder %s25, 1
    %s27 = scalar_select %p26, 0, %s25
    %s28 = sadd.s32 1, %s17
    %s29 = scalar_select %p26, %s28, %s17
    %p30 = scmp.ge.s32.totalorder %s29, 1
    %s31 = scalar_select %p30, 0, %s29
    %s32 = sadd.s32 1, %s16
    %s33 = scalar_select %p30, %s32, %s16
    %p34 = scmp.ge.s32.totalorder %s33, 2
    %s35 = scalar_select %p34, 0, %s33
    %s36 = ssub.s32 %s16, %s35
    %s37 = ssub.s32 %s18, %s27
    %s38 = sor.u32 %s36, %s37
    %p39 = scmp.eq.s32.totalorder %s38, 0
    %s41 = sadd.s32 %s40, 1
    %s42 = scalar_select %p39, %s40, %s41
    %p45 = pneg %p39
    %p46 = scmp.eq.s32.totalorder %s9, 1
    %p47 = por %p45, %p46
    %p48 = scmp.ne.s32.totalorder %s40, %s43
    %p49 = scmp.eq.s32.totalorder %s9, 0
    %p50 = por %p48, %p49
    %p51 = scmp.ne.s32.totalorder %s40, %s43
    %p52 = scmp.eq.s32.totalorder %s14, 1
    %p53 = por %p51, %p52
    %p54 = scmp.ne.s32.totalorder %s43, %s44
    %p55 = scmp.eq.s32.totalorder %s14, 0
    %p56 = por %p54, %p55
    %p57 = scmp.ne.s32.totalorder %s43, %s44
    %p58 = scmp.eq.s32.totalorder %s15, 1
    %p59 = por %p57, %p58
    %p61 = scmp.ne.s32.totalorder %s44, %s60
    %p62 = scmp.eq.s32.totalorder %s15, 0
    %p63 = por %p61, %p62
    %s64 = ssub.s32 %s18, %s27
    %s65 = ssub.s32 %s17, %s31
    %s66 = sor.u32 %s64, %s65
    %p67 = scmp.eq.s32.totalorder %s66, 0
    %s69 = sadd.s32 %s68, 1
    %s70 = scalar_select %p67, %s68, %s69
    %p73 = pneg %p67
    %p74 = scmp.eq.s32.totalorder %s9, 1
    %p75 = por %p73, %p74
    %p76 = scmp.ne.s32.totalorder %s68, %s71
    %p77 = scmp.eq.s32.totalorder %s9, 0
    %p78 = por %p76, %p77
    %p79 = scmp.ne.s32.totalorder %s68, %s71
    %p80 = scmp.eq.s32.totalorder %s14, 1
    %p81 = por %p79, %p80
    %p82 = scmp.ne.s32.totalorder %s71, %s72
    %p83 = scmp.eq.s32.totalorder %s14, 0
    %p84 = por %p82, %p83
    %p85 = scmp.ne.s32.totalorder %s71, %s72
    %p86 = scmp.eq.s32.totalorder %s15, 1
    %p87 = por %p85, %p86
    %p89 = scmp.ne.s32.totalorder %s72, %s88
    %p90 = scmp.eq.s32.totalorder %s15, 0
    %p91 = por %p89, %p90
    %s92 = ssub.s32 %s17, %s31
    %p93 = scmp.eq.s32.totalorder %s92, 0
    %s95 = sadd.s32 %s94, 1
    %s96 = scalar_select %p93, %s94, %s95
    %p99 = pneg %p93
    %p100 = scmp.eq.s32.totalorder %s9, 1
    %p101 = por %p99, %p100
    %p102 = scmp.ne.s32.totalorder %s94, %s97
    %p103 = scmp.eq.s32.totalorder %s9, 0
    %p104 = por %p102, %p103
    %p105 = scmp.ne.s32.totalorder %s94, %s97
    %p106 = scmp.eq.s32.totalorder %s14, 1
    %p107 = por %p105, %p106
    %p108 = scmp.ne.s32.totalorder %s97, %s98
    %p109 = scmp.eq.s32.totalorder %s14, 0
    %p110 = por %p108, %p109
    %p111 = scmp.ne.s32.totalorder %s97, %s98
    %p112 = scmp.eq.s32.totalorder %s15, 1
    %p113 = por %p111, %p112
    %p115 = scmp.ne.s32.totalorder %s98, %s114
    %p116 = scmp.eq.s32.totalorder %s15, 0
    %p117 = por %p115, %p116
    %s118 = ssub.s32 %s16, %s35
    %s119 = ssub.s32 %s17, %s31
    %s120 = sor.u32 %s118, %s119
    %p121 = scmp.eq.s32.totalorder %s120, 0
    %s123 = sadd.s32 %s122, 1
    %s124 = scalar_select %p121, %s122, %s123
    %p127 = pneg %p121
    %p128 = scmp.eq.s32.totalorder %s9, 1
    %p129 = por %p127, %p128
    %p130 = scmp.ne.s32.totalorder %s122, %s125
    %p131 = scmp.eq.s32.totalorder %s9, 0
    %p132 = por %p130, %p131
    %p133 = scmp.ne.s32.totalorder %s122, %s125
    %p134 = scmp.eq.s32.totalorder %s14, 1
    %p135 = por %p133, %p134
    %p136 = scmp.ne.s32.totalorder %s125, %s126
    %p137 = scmp.eq.s32.totalorder %s14, 0
    %p138 = por %p136, %p137
    %p139 = scmp.ne.s32.totalorder %s125, %s126
    %p140 = scmp.eq.s32.totalorder %s15, 1
    %p141 = por %p139, %p140
    %p143 = scmp.ne.s32.totalorder %s126, %s142
    %p144 = scmp.eq.s32.totalorder %s15, 0
    %p145 = por %p143, %p144
    %p146 = scmp.le.s32.totalorder 1, %s9
    %p147 = scmp.lt.s32.totalorder %s9, 3
    %p148 = pnand %p146, %p147
    %p149 = pneg %p148
    // Predicated region
    $region9: #{bottleneck_forward.3} parent=5 // pred_check
      _
    $region10: #{bottleneck_forward.3} parent=5 // pred_check_branch
      %151 = sbr.rel (%p148) target = $region12
    $region11: #{bottleneck_forward.3} parent=5 // pred_region
      %s152 = ssub.s32 %s9, 1
      // Predicated region
      $region13: #{bottleneck_forward.3} parent=11 // pred_check
        %p153 = pneg %p84
      $region14: #{bottleneck_forward.3} parent=11 // pred_check_branch
        %155 = sbr.rel (%p153) target = $region16
      $region15: #{bottleneck_forward.3} parent=11 // pred_region
        %s156 = smul.u32 16, %s21
        %p157 = scmp.lt.s32.totalorder %s156, 15
        %s158 = scalar_select %p157, %s156, 15
        %p159 = scmp.lt.s32.totalorder %s20, 0
        %s160 = scalar_select %p159, %s20, 0
        %s161 = sadd.s32 %s160, %s158
        %s162 = smul.addr %s161, 4
        %s163 = scalar_lea.vmem %s1, %s162
        %s164 = smul.u32 16, %s21
      $region16: #{bottleneck_forward.3} parent=11 // pred_fallthru
        _
      // Predicated region
      $region17: #{bottleneck_forward.3} parent=11 // pred_check
        %p165 = pneg %p110
      $region18: #{bottleneck_forward.3} parent=11 // pred_check_branch
        %167 = sbr.rel (%p165) target = $region20
      $region19: #{bottleneck_forward.3} parent=11 // pred_region
        %p168 = scmp.lt.s32.totalorder %s20, 0
        %s169 = scalar_select %p168, %s20, 0
        %s170 = scalar_lea.vmem %s2, %s169
      $region20: #{bottleneck_forward.3} parent=11 // pred_fallthru
        _
    $region12: #{bottleneck_forward.3} parent=5 // pred_fallthru
      _
    %p171 = scmp.lt.s32.totalorder %s9, 2
    // Predicated region
    $region21: #{bottleneck_forward.3} parent=5 // pred_check
      %p172 = pneg %p171
    $region22: #{bottleneck_forward.3} parent=5 // pred_check_branch
      %174 = sbr.rel (%p172) target = $region24
    $region23: #{bottleneck_forward.3} parent=5 // pred_region
      // Predicated region
      $region25: #{bottleneck_forward.3} parent=23 // pred_check
        %p175 = pneg %p50
      $region26: #{bottleneck_forward.3} parent=23 // pred_check_branch
        %177 = sbr.rel (%p175) target = $region28
      $region27: #{bottleneck_forward.3} parent=23 // pred_region
        %s178 = smul.u32 32, %s16
        %p179 = scmp.lt.s32.totalorder %s178, 63
        %s180 = scalar_select %p179, %s178, 63
        %p181 = scmp.lt.s32.totalorder %s18, 0
        %s182 = scalar_select %p181, %s18, 0
        %s183 = sadd.s32 %s182, %s180
        %s184 = smul.addr %s183, 4
        %s185 = scalar_lea.vmem %s0, %s184
        %s186 = smul.u32 32, %s16
      $region28: #{bottleneck_forward.3} parent=23 // pred_fallthru
        _
    $region24: #{bottleneck_forward.3} parent=5 // pred_fallthru
      _
    %p187 = scmp.le.s32.totalorder 1, %s9
    %p188 = scmp.lt.s32.totalorder %s9, 3
    %p189 = pnand %p187, %p188
    %p190 = pneg %p189
    // Predicated region
    $region29: #{bottleneck_forward.3} parent=5 // pred_check
      _
    $region30: #{bottleneck_forward.3} parent=5 // pred_check_branch
      %192 = sbr.rel (%p189) target = $region32
    $region31: #{bottleneck_forward.3} parent=5 // pred_region
      %s193 = ssub.s32 %s9, 1
      %s194 = smul.u32 32, %s19
      %p195 = scmp.lt.s32.totalorder %s194, 63
      %s196 = scalar_select %p195, %s194, 63
      %p197 = scmp.lt.s32.totalorder %s21, 0
      %s198 = scalar_select %p197, %s21, 0
      %s199 = sadd.s32 %s198, %s196
      %s200 = smul.addr %s199, 4
      %s201 = scalar_lea.vmem %s0, %s200
      %p202 = pneg %p56
      %p203 = pneg %p53
      %s204 = smul.u32 16, %s21
      %p205 = scmp.lt.s32.totalorder %s204, 15
      %s206 = scalar_select %p205, %s204, 15
      %p207 = scmp.lt.s32.totalorder %s20, 0
      %s208 = scalar_select %p207, %s20, 0
      %s209 = sadd.s32 %s208, %s206
      %s210 = smul.addr %s209, 4
      %s211 = scalar_lea.vmem %s1, %s210
      %p212 = pneg %p84
      %p213 = pneg %p81
      %p214 = scmp.lt.s32.totalorder %s20, 0
      %s215 = scalar_select %p214, %s20, 0
      %s216 = scalar_lea.vmem %s2, %s215
      %p217 = pneg %p110
      %p218 = pneg %p107
      %p219 = pneg %p138
      %p220 = pneg %p135
      %s221 = smul.u32 32, %s19
      %p222 = scmp.lt.s32.totalorder %s221, 63
      %s223 = scalar_select %p222, %s221, 63
      %p224 = scmp.lt.s32.totalorder %s20, 0
      %s225 = scalar_select %p224, %s20, 0
      %s226 = sadd.s32 %s225, %s223
      %s227 = smul.addr %s226, 4
      %s228 = scalar_lea.vmem %s3, %s227
      %s229 = smul.u32 32, %s19
      %p230 = scmp.lt.s32.totalorder %s229, 63
      %s231 = scalar_select %p230, %s229, 63
      %p232 = scmp.lt.s32.totalorder %s21, 0
      %s233 = scalar_select %p232, %s21, 0
      %s234 = sadd.s32 %s233, %s231
      %s235 = smul.addr %s234, 4
      %s236 = scalar_lea.vmem %s0, %s235
      %s237 = smul.u32 32, %s19
      %s238 = smul.u32 16, %s21
      %p239 = scmp.lt.s32.totalorder %s238, 15
      %s240 = scalar_select %p239, %s238, 15
      %p241 = scmp.lt.s32.totalorder %s20, 0
      %s242 = scalar_select %p241, %s20, 0
      %s243 = sadd.s32 %s242, %s240
      %s244 = smul.addr %s243, 4
      %s245 = scalar_lea.vmem %s1, %s244
      %s246 = smul.u32 16, %s21
      %p247 = scmp.lt.s32.totalorder %s20, 0
      %s248 = scalar_select %p247, %s20, 0
      %s249 = scalar_lea.vmem %s2, %s248
      %s250 = smul.u32 32, %s19
      %p251 = scmp.lt.s32.totalorder %s250, 63
      %s252 = scalar_select %p251, %s250, 63
      %p253 = scmp.lt.s32.totalorder %s20, 0
      %s254 = scalar_select %p253, %s20, 0
      %s255 = sadd.s32 %s254, %s252
      %s256 = smul.addr %s255, 4
      %s257 = scalar_lea.vmem %s3, %s256
      %s258 = smul.u32 32, %s19
      %p260 = scmp.eq.s32.totalorder %s21, 0
      // Predicated region
      $region33: #{bottleneck_forward.3} parent=31 // pred_check
        %p261 = pneg %p260
      $region34: #{bottleneck_forward.3} parent=31 // pred_check_branch
        %263 = sbr.rel (%p261) target = $region36
      $region35: #{bottleneck_forward.3} parent=31 // pred_region
        %264 = vst [vmem:[#allocation2] sm:$0xff] 0.0
        %265 = vst [vmem:[#allocation2 + $0x8] sm:$0xff] 0.0
        %266 = vst [vmem:[#allocation2 + $0x10] sm:$0xff] 0.0
        %267 = vst [vmem:[#allocation2 + $0x18] sm:$0xff] 0.0
        %268 = vst [vmem:[#allocation2 + $0x20] sm:$0xff] 0.0
        %269 = vst [vmem:[#allocation2 + $0x28] sm:$0xff] 0.0
        %270 = vst [vmem:[#allocation2 + $0x30] sm:$0xff] 0.0
        %271 = vst [vmem:[#allocation2 + $0x38] sm:$0xff] 0.0
        %272 = vst [vmem:[#allocation2 + $0x40] sm:$0xff] 0.0
        %273 = vst [vmem:[#allocation2 + $0x48] sm:$0xff] 0.0
        %274 = vst [vmem:[#allocation2 + $0x50] sm:$0xff] 0.0
        %275 = vst [vmem:[#allocation2 + $0x58] sm:$0xff] 0.0
        %276 = vst [vmem:[#allocation2 + $0x60] sm:$0xff] 0.0
        %277 = vst [vmem:[#allocation2 + $0x68] sm:$0xff] 0.0
        %278 = vst [vmem:[#allocation2 + $0x70] sm:$0xff] 0.0
        %279 = vst [vmem:[#allocation2 + $0x78] sm:$0xff] 0.0
        %280 = vst [vmem:[#allocation2 + $0x80] sm:$0xff] 0.0
        %281 = vst [vmem:[#allocation2 + $0x88] sm:$0xff] 0.0
        %282 = vst [vmem:[#allocation2 + $0x90] sm:$0xff] 0.0
        %283 = vst [vmem:[#allocation2 + $0x98] sm:$0xff] 0.0
        %284 = vst [vmem:[#allocation2 + $0xa0] sm:$0xff] 0.0
        %285 = vst [vmem:[#allocation2 + $0xa8] sm:$0xff] 0.0
        %286 = vst [vmem:[#allocation2 + $0xb0] sm:$0xff] 0.0
        %287 = vst [vmem:[#allocation2 + $0xb8] sm:$0xff] 0.0
        %288 = vst [vmem:[#allocation2 + $0xc0] sm:$0xff] 0.0
        %289 = vst [vmem:[#allocation2 + $0xc8] sm:$0xff] 0.0
        %290 = vst [vmem:[#allocation2 + $0xd0] sm:$0xff] 0.0
        %291 = vst [vmem:[#allocation2 + $0xd8] sm:$0xff] 0.0
        %292 = vst [vmem:[#allocation2 + $0xe0] sm:$0xff] 0.0
        %293 = vst [vmem:[#allocation2 + $0xe8] sm:$0xff] 0.0
        %294 = vst [vmem:[#allocation2 + $0xf0] sm:$0xff] 0.0
        %295 = vst [vmem:[#allocation2 + $0xf8] sm:$0xff] 0.0
      $region36: #{bottleneck_forward.3} parent=31 // pred_fallthru
        _
      %v296 = vld [vmem:[#allocation2] sm:$0xff]
      %v297 = vld [vmem:[#allocation2 + $0x8] sm:$0xff]
      %v298 = vld [vmem:[#allocation2 + $0x10] sm:$0xff]
      %v299 = vld [vmem:[#allocation2 + $0x18] sm:$0xff]
      %v300 = vld [vmem:[#allocation2 + $0x20] sm:$0xff]
      %v301 = vld [vmem:[#allocation2 + $0x28] sm:$0xff]
      %v302 = vld [vmem:[#allocation2 + $0x30] sm:$0xff]
      %v303 = vld [vmem:[#allocation2 + $0x38] sm:$0xff]
      %v304 = vld [vmem:[#allocation2 + $0x40] sm:$0xff]
      %v305 = vld [vmem:[#allocation2 + $0x48] sm:$0xff]
      %v306 = vld [vmem:[#allocation2 + $0x50] sm:$0xff]
      %v307 = vld [vmem:[#allocation2 + $0x58] sm:$0xff]
      %v308 = vld [vmem:[#allocation2 + $0x60] sm:$0xff]
      %v309 = vld [vmem:[#allocation2 + $0x68] sm:$0xff]
      %v310 = vld [vmem:[#allocation2 + $0x70] sm:$0xff]
      %v311 = vld [vmem:[#allocation2 + $0x78] sm:$0xff]
      %v312 = vld [vmem:[#allocation2 + $0x80] sm:$0xff]
      %v313 = vld [vmem:[#allocation2 + $0x88] sm:$0xff]
      %v314 = vld [vmem:[#allocation2 + $0x90] sm:$0xff]
      %v315 = vld [vmem:[#allocation2 + $0x98] sm:$0xff]
      %v316 = vld [vmem:[#allocation2 + $0xa0] sm:$0xff]
      %v317 = vld [vmem:[#allocation2 + $0xa8] sm:$0xff]
      %v318 = vld [vmem:[#allocation2 + $0xb0] sm:$0xff]
      %v319 = vld [vmem:[#allocation2 + $0xb8] sm:$0xff]
      %v320 = vld [vmem:[#allocation2 + $0xc0] sm:$0xff]
      %v321 = vld [vmem:[#allocation2 + $0xc8] sm:$0xff]
      %v322 = vld [vmem:[#allocation2 + $0xd0] sm:$0xff]
      %v323 = vld [vmem:[#allocation2 + $0xd8] sm:$0xff]
      %v324 = vld [vmem:[#allocation2 + $0xe0] sm:$0xff]
      %v325 = vld [vmem:[#allocation2 + $0xe8] sm:$0xff]
      %v326 = vld [vmem:[#allocation2 + $0xf0] sm:$0xff]
      %v327 = vld [vmem:[#allocation2 + $0xf8] sm:$0xff]
      %v328 = vld [vmem:[%s236] sm:$0xf]
      %v329 = vld [vmem:[%s236 + $0x4] sm:$0xf]
      %v330 = vld [vmem:[%s236 + $0x8] sm:$0xf]
      %v331 = vld [vmem:[%s236 + $0xc] sm:$0xf]
      %v332 = vld [vmem:[%s236 + $0x10] sm:$0xf]
      %v333 = vld [vmem:[%s236 + $0x14] sm:$0xf]
      %v334 = vld [vmem:[%s236 + $0x18] sm:$0xf]
      %v335 = vld [vmem:[%s236 + $0x1c] sm:$0xf]
      %v336 = vld [vmem:[%s236 + $0x20] sm:$0xf]
      %v337 = vld [vmem:[%s236 + $0x24] sm:$0xf]
      %v338 = vld [vmem:[%s236 + $0x28] sm:$0xf]
      %v339 = vld [vmem:[%s236 + $0x2c] sm:$0xf]
      %v340 = vld [vmem:[%s236 + $0x30] sm:$0xf]
      %v341 = vld [vmem:[%s236 + $0x34] sm:$0xf]
      %v342 = vld [vmem:[%s236 + $0x38] sm:$0xf]
      %v343 = vld [vmem:[%s236 + $0x3c] sm:$0xf]
      %v344 = vld [vmem:[%s236 + $0x40] sm:$0xf]
      %v345 = vld [vmem:[%s236 + $0x44] sm:$0xf]
      %v346 = vld [vmem:[%s236 + $0x48] sm:$0xf]
      %v347 = vld [vmem:[%s236 + $0x4c] sm:$0xf]
      %v348 = vld [vmem:[%s236 + $0x50] sm:$0xf]
      %v349 = vld [vmem:[%s236 + $0x54] sm:$0xf]
      %v350 = vld [vmem:[%s236 + $0x58] sm:$0xf]
      %v351 = vld [vmem:[%s236 + $0x5c] sm:$0xf]
      %v352 = vld [vmem:[%s236 + $0x60] sm:$0xf]
      %v353 = vld [vmem:[%s236 + $0x64] sm:$0xf]
      %v354 = vld [vmem:[%s236 + $0x68] sm:$0xf]
      %v355 = vld [vmem:[%s236 + $0x6c] sm:$0xf]
      %v356 = vld [vmem:[%s236 + $0x70] sm:$0xf]
      %v357 = vld [vmem:[%s236 + $0x74] sm:$0xf]
      %v358 = vld [vmem:[%s236 + $0x78] sm:$0xf]
      %v359 = vld [vmem:[%s236 + $0x7c] sm:$0xf]
      %v360 = vld [vmem:[%s245] sm:$0xf]
      %v361 = vld [vmem:[%s245 + $0x4] sm:$0xf]
      %v362 = vld [vmem:[%s245 + $0x8] sm:$0xf]
      %v363 = vld [vmem:[%s245 + $0xc] sm:$0xf]
      %v364 = vld [vmem:[%s245 + $0x10] sm:$0xf]
      %v365 = vld [vmem:[%s245 + $0x14] sm:$0xf]
      %v366 = vld [vmem:[%s245 + $0x18] sm:$0xf]
      %v367 = vld [vmem:[%s245 + $0x1c] sm:$0xf]
      %v368 = vld [vmem:[%s245 + $0x20] sm:$0xf]
      %v369 = vld [vmem:[%s245 + $0x24] sm:$0xf]
      %v370 = vld [vmem:[%s245 + $0x28] sm:$0xf]
      %v371 = vld [vmem:[%s245 + $0x2c] sm:$0xf]
      %v372 = vld [vmem:[%s245 + $0x30] sm:$0xf]
      %v373 = vld [vmem:[%s245 + $0x34] sm:$0xf]
      %v374 = vld [vmem:[%s245 + $0x38] sm:$0xf]
      %v375 = vld [vmem:[%s245 + $0x3c] sm:$0xf]
      %v408 = vunpack.c.l.b16 %v328
      %v409 = vunpack.c.l.b16 %v329
      %v410 = vunpack.c.l.b16 %v330
      %v411 = vunpack.c.l.b16 %v331
      %v412 = vunpack.c.l.b16 %v332
      %v413 = vunpack.c.l.b16 %v333
      %v414 = vunpack.c.l.b16 %v334
      %v415 = vunpack.c.l.b16 %v335
      %v416 = vunpack.c.l.b16 %v336
      %v417 = vunpack.c.l.b16 %v337
      %v418 = vunpack.c.l.b16 %v338
      %v419 = vunpack.c.l.b16 %v339
      %v420 = vunpack.c.l.b16 %v340
      %v421 = vunpack.c.l.b16 %v341
      %v422 = vunpack.c.l.b16 %v342
      %v423 = vunpack.c.l.b16 %v343
      %v424 = vunpack.c.l.b16 %v344
      %v425 = vunpack.c.l.b16 %v345
      %v426 = vunpack.c.l.b16 %v346
      %v427 = vunpack.c.l.b16 %v347
      %v428 = vunpack.c.l.b16 %v348
      %v429 = vunpack.c.l.b16 %v349
      %v430 = vunpack.c.l.b16 %v350
      %v431 = vunpack.c.l.b16 %v351
      %v432 = vunpack.c.l.b16 %v352
      %v433 = vunpack.c.l.b16 %v353
      %v434 = vunpack.c.l.b16 %v354
      %v435 = vunpack.c.l.b16 %v355
      %v436 = vunpack.c.l.b16 %v356
      %v437 = vunpack.c.l.b16 %v357
      %v438 = vunpack.c.l.b16 %v358
      %v439 = vunpack.c.l.b16 %v359
      %v440 = vpack.c.b16 %v409, %v408
      %v441 = vpack.c.b16 %v411, %v410
      %v442 = vpack.c.b16 %v413, %v412
      %v443 = vpack.c.b16 %v415, %v414
      %v444 = vpack.c.b16 %v417, %v416
      %v445 = vpack.c.b16 %v419, %v418
      %v446 = vpack.c.b16 %v421, %v420
      %v447 = vpack.c.b16 %v423, %v422
      %v448 = vpack.c.b16 %v425, %v424
      %v449 = vpack.c.b16 %v427, %v426
      %v450 = vpack.c.b16 %v429, %v428
      %v451 = vpack.c.b16 %v431, %v430
      %v452 = vpack.c.b16 %v433, %v432
      %v453 = vpack.c.b16 %v435, %v434
      %v454 = vpack.c.b16 %v437, %v436
      %v455 = vpack.c.b16 %v439, %v438
      %v488 = vunpack.c.l.b16 %v360
      %v489 = vunpack.c.l.b16 %v361
      %v490 = vunpack.c.l.b16 %v362
      %v491 = vunpack.c.l.b16 %v363
      %v492 = vunpack.c.l.b16 %v364
      %v493 = vunpack.c.l.b16 %v365
      %v494 = vunpack.c.l.b16 %v366
      %v495 = vunpack.c.l.b16 %v367
      %v496 = vunpack.c.l.b16 %v368
      %v497 = vunpack.c.l.b16 %v369
      %v498 = vunpack.c.l.b16 %v370
      %v499 = vunpack.c.l.b16 %v371
      %v500 = vunpack.c.l.b16 %v372
      %v501 = vunpack.c.l.b16 %v373
      %v502 = vunpack.c.l.b16 %v374
      %v503 = vunpack.c.l.b16 %v375
      %v504 = vpack.c.b16 %v489, %v488
      %v505 = vpack.c.b16 %v491, %v490
      %v506 = vpack.c.b16 %v493, %v492
      %v507 = vpack.c.b16 %v495, %v494
      %v508 = vpack.c.b16 %v497, %v496
      %v509 = vpack.c.b16 %v499, %v498
      %v510 = vpack.c.b16 %v501, %v500
      %v511 = vpack.c.b16 %v503, %v502
      %520 = vmatprep.subr.bf16.mxu0 0
      %521 = vmatpush1.bf16.msra.mxu0 %v511
      %522 = vmatprep.subr.bf16.mxu0 0
      %523 = vmatpush1.bf16.msra.mxu0 %v510
      %524 = vmatprep.subr.bf16.mxu0 0
      %525 = vmatpush1.bf16.msra.mxu0 %v509
      %526 = vmatprep.subr.bf16.mxu0 0
      %527 = vmatpush1.bf16.msra.mxu0 %v508
      %528 = vmatprep.subr.bf16.mxu0 0
      %529 = vmatpush1.bf16.msra.mxu0 %v507
      %530 = vmatprep.subr.bf16.mxu0 0
      %531 = vmatpush1.bf16.msra.mxu0 %v506
      %532 = vmatprep.subr.bf16.mxu0 0
      %533 = vmatpush1.bf16.msra.mxu0 %v505
      %534 = vmatprep.subr.bf16.mxu0 0
      %535 = vmatpush1.bf16.msra.mxu0 %v504
      %536 = vmatprep.subr.bf16.mxu0 0
      %537 = vmatpush2.bf16.msra.mxu0 0
      %538 = vmatprep.subr.bf16.mxu0 0
      %539 = vmatpush2.bf16.msra.mxu0 0
      %540 = vmatprep.subr.bf16.mxu0 0
      %541 = vmatpush2.bf16.msra.mxu0 0
      %542 = vmatprep.subr.bf16.mxu0 0
      %543 = vmatpush2.bf16.msra.mxu0 0
      %544 = vmatprep.subr.bf16.mxu0 0
      %545 = vmatpush2.bf16.msra.mxu0 0
      %546 = vmatprep.subr.bf16.mxu0 0
      %547 = vmatpush2.bf16.msra.mxu0 0
      %548 = vmatprep.subr.bf16.mxu0 0
      %549 = vmatpush2.bf16.msra.mxu0 0
      %550 = vmatprep.subr.bf16.mxu0 0
      %551 = vmatpush2.bf16.msra.mxu0 0
      %552 = vmatprep.mubr.bf16.mxu0 0
      %553 = vmatmul.mubr.bf16.gmra.mxu0 %v440
      %v554 = vpop.f32.mrf.mxu0
      %v555 = vadd.f32 0.0, %v554
      %v556 = vpop.f32.mrf.mxu0
      %v557 = vpop.f32.mrf.mxu0
      %v558 = vadd.f32 0.0, %v557
      %v559 = vpop.f32.mrf.mxu0
      %560 = vmatprep.mubr.bf16.mxu0 0
      %561 = vmatmul.mubr.bf16.gmra.mxu0 %v441
      %v562 = vpop.f32.mrf.mxu0
      %v563 = vadd.f32 0.0, %v562
      %v564 = vpop.f32.mrf.mxu0
      %v565 = vpop.f32.mrf.mxu0
      %v566 = vadd.f32 0.0, %v565
      %v567 = vpop.f32.mrf.mxu0
      %568 = vmatprep.mubr.bf16.mxu0 0
      %569 = vmatmul.mubr.bf16.gmra.mxu0 %v442
      %v570 = vpop.f32.mrf.mxu0
      %v571 = vadd.f32 0.0, %v570
      %v572 = vpop.f32.mrf.mxu0
      %v573 = vpop.f32.mrf.mxu0
      %v574 = vadd.f32 0.0, %v573
      %v575 = vpop.f32.mrf.mxu0
      %576 = vmatprep.mubr.bf16.mxu0 0
      %577 = vmatmul.mubr.bf16.gmra.mxu0 %v443
      %v578 = vpop.f32.mrf.mxu0
      %v579 = vadd.f32 0.0, %v578
      %v580 = vpop.f32.mrf.mxu0
      %v581 = vpop.f32.mrf.mxu0
      %v582 = vadd.f32 0.0, %v581
      %v583 = vpop.f32.mrf.mxu0
      %584 = vmatprep.mubr.bf16.mxu0 0
      %585 = vmatmul.mubr.bf16.gmra.mxu0 %v444
      %v586 = vpop.f32.mrf.mxu0
      %v587 = vadd.f32 0.0, %v586
      %v588 = vpop.f32.mrf.mxu0
      %v589 = vpop.f32.mrf.mxu0
      %v590 = vadd.f32 0.0, %v589
      %v591 = vpop.f32.mrf.mxu0
      %592 = vmatprep.mubr.bf16.mxu0 0
      %593 = vmatmul.mubr.bf16.gmra.mxu0 %v445
      %v594 = vpop.f32.mrf.mxu0
      %v595 = vadd.f32 0.0, %v594
      %v596 = vpop.f32.mrf.mxu0
      %v597 = vpop.f32.mrf.mxu0
      %v598 = vadd.f32 0.0, %v597
      %v599 = vpop.f32.mrf.mxu0
      %600 = vmatprep.mubr.bf16.mxu0 0
      %601 = vmatmul.mubr.bf16.gmra.mxu0 %v446
      %v602 = vpop.f32.mrf.mxu0
      %v603 = vadd.f32 0.0, %v602
      %v604 = vpop.f32.mrf.mxu0
      %v605 = vpop.f32.mrf.mxu0
      %v606 = vadd.f32 0.0, %v605
      %v607 = vpop.f32.mrf.mxu0
      %608 = vmatprep.mubr.bf16.mxu0 0
      %609 = vmatmul.mubr.bf16.gmra.mxu0 %v447
      %v610 = vpop.f32.mrf.mxu0
      %v611 = vadd.f32 0.0, %v610
      %v612 = vpop.f32.mrf.mxu0
      %v613 = vpop.f32.mrf.mxu0
      %v614 = vadd.f32 0.0, %v613
      %v615 = vpop.f32.mrf.mxu0
      %616 = vmatprep.mubr.bf16.mxu0 0
      %617 = vmatmul.mubr.bf16.gmra.mxu0 %v448
      %v618 = vpop.f32.mrf.mxu0
      %v619 = vadd.f32 0.0, %v618
      %v620 = vpop.f32.mrf.mxu0
      %v621 = vpop.f32.mrf.mxu0
      %v622 = vadd.f32 0.0, %v621
      %v623 = vpop.f32.mrf.mxu0
      %624 = vmatprep.mubr.bf16.mxu0 0
      %625 = vmatmul.mubr.bf16.gmra.mxu0 %v449
      %v626 = vpop.f32.mrf.mxu0
      %v627 = vadd.f32 0.0, %v626
      %v628 = vpop.f32.mrf.mxu0
      %v629 = vpop.f32.mrf.mxu0
      %v630 = vadd.f32 0.0, %v629
      %v631 = vpop.f32.mrf.mxu0
      %632 = vmatprep.mubr.bf16.mxu0 0
      %633 = vmatmul.mubr.bf16.gmra.mxu0 %v450
      %v634 = vpop.f32.mrf.mxu0
      %v635 = vadd.f32 0.0, %v634
      %v636 = vpop.f32.mrf.mxu0
      %v637 = vpop.f32.mrf.mxu0
      %v638 = vadd.f32 0.0, %v637
      %v639 = vpop.f32.mrf.mxu0
      %640 = vmatprep.mubr.bf16.mxu0 0
      %641 = vmatmul.mubr.bf16.gmra.mxu0 %v451
      %v642 = vpop.f32.mrf.mxu0
      %v643 = vadd.f32 0.0, %v642
      %v644 = vpop.f32.mrf.mxu0
      %v645 = vpop.f32.mrf.mxu0
      %v646 = vadd.f32 0.0, %v645
      %v647 = vpop.f32.mrf.mxu0
      %648 = vmatprep.mubr.bf16.mxu0 0
      %649 = vmatmul.mubr.bf16.gmra.mxu0 %v452
      %v650 = vpop.f32.mrf.mxu0
      %v651 = vadd.f32 0.0, %v650
      %v652 = vpop.f32.mrf.mxu0
      %v653 = vpop.f32.mrf.mxu0
      %v654 = vadd.f32 0.0, %v653
      %v655 = vpop.f32.mrf.mxu0
      %656 = vmatprep.mubr.bf16.mxu0 0
      %657 = vmatmul.mubr.bf16.gmra.mxu0 %v453
      %v658 = vpop.f32.mrf.mxu0
      %v659 = vadd.f32 0.0, %v658
      %v660 = vpop.f32.mrf.mxu0
      %v661 = vpop.f32.mrf.mxu0
      %v662 = vadd.f32 0.0, %v661
      %v663 = vpop.f32.mrf.mxu0
      %664 = vmatprep.mubr.bf16.mxu0 0
      %665 = vmatmul.mubr.bf16.gmra.mxu0 %v454
      %v666 = vpop.f32.mrf.mxu0
      %v667 = vadd.f32 0.0, %v666
      %v668 = vpop.f32.mrf.mxu0
      %v669 = vpop.f32.mrf.mxu0
      %v670 = vadd.f32 0.0, %v669
      %v671 = vpop.f32.mrf.mxu0
      %672 = vmatprep.mubr.bf16.mxu0 0
      %673 = vmatmul.mubr.bf16.gmra.mxu0 %v455
      %v674 = vpop.f32.mrf.mxu0
      %v675 = vadd.f32 0.0, %v674
      %v676 = vpop.f32.mrf.mxu0
      %v677 = vpop.f32.mrf.mxu0
      %v678 = vadd.f32 0.0, %v677
      %v679 = vpop.f32.mrf.mxu0
      %680 = vdwg.mxu0
      %v681 = vadd.f32 %v296, %v555
      %v682 = vadd.f32 %v297, %v558
      %v683 = vadd.f32 %v298, %v563
      %v684 = vadd.f32 %v299, %v566
      %v685 = vadd.f32 %v300, %v571
      %v686 = vadd.f32 %v301, %v574
      %v687 = vadd.f32 %v302, %v579
      %v688 = vadd.f32 %v303, %v582
      %v689 = vadd.f32 %v304, %v587
      %v690 = vadd.f32 %v305, %v590
      %v691 = vadd.f32 %v306, %v595
      %v692 = vadd.f32 %v307, %v598
      %v693 = vadd.f32 %v308, %v603
      %v694 = vadd.f32 %v309, %v606
      %v695 = vadd.f32 %v310, %v611
      %v696 = vadd.f32 %v311, %v614
      %v697 = vadd.f32 %v312, %v619
      %v698 = vadd.f32 %v313, %v622
      %v699 = vadd.f32 %v314, %v627
      %v700 = vadd.f32 %v315, %v630
      %v701 = vadd.f32 %v316, %v635
      %v702 = vadd.f32 %v317, %v638
      %v703 = vadd.f32 %v318, %v643
      %v704 = vadd.f32 %v319, %v646
      %v705 = vadd.f32 %v320, %v651
      %v706 = vadd.f32 %v321, %v654
      %v707 = vadd.f32 %v322, %v659
      %v708 = vadd.f32 %v323, %v662
      %v709 = vadd.f32 %v324, %v667
      %v710 = vadd.f32 %v325, %v670
      %v711 = vadd.f32 %v326, %v675
      %v712 = vadd.f32 %v327, %v678
      %713 = vst [vmem:[#allocation2] sm:$0xff] %v681
      %714 = vst [vmem:[#allocation2 + $0x8] sm:$0xff] %v682
      %715 = vst [vmem:[#allocation2 + $0x10] sm:$0xff] %v683
      %716 = vst [vmem:[#allocation2 + $0x18] sm:$0xff] %v684
      %717 = vst [vmem:[#allocation2 + $0x20] sm:$0xff] %v685
      %718 = vst [vmem:[#allocation2 + $0x28] sm:$0xff] %v686
      %719 = vst [vmem:[#allocation2 + $0x30] sm:$0xff] %v687
      %720 = vst [vmem:[#allocation2 + $0x38] sm:$0xff] %v688
      %721 = vst [vmem:[#allocation2 + $0x40] sm:$0xff] %v689
      %722 = vst [vmem:[#allocation2 + $0x48] sm:$0xff] %v690
      %723 = vst [vmem:[#allocation2 + $0x50] sm:$0xff] %v691
      %724 = vst [vmem:[#allocation2 + $0x58] sm:$0xff] %v692
      %725 = vst [vmem:[#allocation2 + $0x60] sm:$0xff] %v693
      %726 = vst [vmem:[#allocation2 + $0x68] sm:$0xff] %v694
      %727 = vst [vmem:[#allocation2 + $0x70] sm:$0xff] %v695
      %728 = vst [vmem:[#allocation2 + $0x78] sm:$0xff] %v696
      %729 = vst [vmem:[#allocation2 + $0x80] sm:$0xff] %v697
      %730 = vst [vmem:[#allocation2 + $0x88] sm:$0xff] %v698
      %731 = vst [vmem:[#allocation2 + $0x90] sm:$0xff] %v699
      %732 = vst [vmem:[#allocation2 + $0x98] sm:$0xff] %v700
      %733 = vst [vmem:[#allocation2 + $0xa0] sm:$0xff] %v701
      %734 = vst [vmem:[#allocation2 + $0xa8] sm:$0xff] %v702
      %735 = vst [vmem:[#allocation2 + $0xb0] sm:$0xff] %v703
      %736 = vst [vmem:[#allocation2 + $0xb8] sm:$0xff] %v704
      %737 = vst [vmem:[#allocation2 + $0xc0] sm:$0xff] %v705
      %738 = vst [vmem:[#allocation2 + $0xc8] sm:$0xff] %v706
      %739 = vst [vmem:[#allocation2 + $0xd0] sm:$0xff] %v707
      %740 = vst [vmem:[#allocation2 + $0xd8] sm:$0xff] %v708
      %741 = vst [vmem:[#allocation2 + $0xe0] sm:$0xff] %v709
      %742 = vst [vmem:[#allocation2 + $0xe8] sm:$0xff] %v710
      %743 = vst [vmem:[#allocation2 + $0xf0] sm:$0xff] %v711
      %744 = vst [vmem:[#allocation2 + $0xf8] sm:$0xff] %v712
      // Predicated region
      $region37: #{bottleneck_forward.3} parent=31 // pred_check
        %p745 = pneg %p260
      $region38: #{bottleneck_forward.3} parent=31 // pred_check_branch
        %747 = sbr.rel (%p745) target = $region40
      $region39: #{bottleneck_forward.3} parent=31 // pred_region
        %v748 = vld [vmem:[#allocation2] sm:$0xff]
        %v749 = vld [vmem:[#allocation2 + $0x8] sm:$0xff]
        %v750 = vld [vmem:[#allocation2 + $0x10] sm:$0xff]
        %v751 = vld [vmem:[#allocation2 + $0x18] sm:$0xff]
        %v752 = vld [vmem:[#allocation2 + $0x20] sm:$0xff]
        %v753 = vld [vmem:[#allocation2 + $0x28] sm:$0xff]
        %v754 = vld [vmem:[#allocation2 + $0x30] sm:$0xff]
        %v755 = vld [vmem:[#allocation2 + $0x38] sm:$0xff]
        %v756 = vld [vmem:[#allocation2 + $0x40] sm:$0xff]
        %v757 = vld [vmem:[#allocation2 + $0x48] sm:$0xff]
        %v758 = vld [vmem:[#allocation2 + $0x50] sm:$0xff]
        %v759 = vld [vmem:[#allocation2 + $0x58] sm:$0xff]
        %v760 = vld [vmem:[#allocation2 + $0x60] sm:$0xff]
        %v761 = vld [vmem:[#allocation2 + $0x68] sm:$0xff]
        %v762 = vld [vmem:[#allocation2 + $0x70] sm:$0xff]
        %v763 = vld [vmem:[#allocation2 + $0x78] sm:$0xff]
        %v764 = vld [vmem:[#allocation2 + $0x80] sm:$0xff]
        %v765 = vld [vmem:[#allocation2 + $0x88] sm:$0xff]
        %v766 = vld [vmem:[#allocation2 + $0x90] sm:$0xff]
        %v767 = vld [vmem:[#allocation2 + $0x98] sm:$0xff]
        %v768 = vld [vmem:[#allocation2 + $0xa0] sm:$0xff]
        %v769 = vld [vmem:[#allocation2 + $0xa8] sm:$0xff]
        %v770 = vld [vmem:[#allocation2 + $0xb0] sm:$0xff]
        %v771 = vld [vmem:[#allocation2 + $0xb8] sm:$0xff]
        %v772 = vld [vmem:[#allocation2 + $0xc0] sm:$0xff]
        %v773 = vld [vmem:[#allocation2 + $0xc8] sm:$0xff]
        %v774 = vld [vmem:[#allocation2 + $0xd0] sm:$0xff]
        %v775 = vld [vmem:[#allocation2 + $0xd8] sm:$0xff]
        %v776 = vld [vmem:[#allocation2 + $0xe0] sm:$0xff]
        %v777 = vld [vmem:[#allocation2 + $0xe8] sm:$0xff]
        %v778 = vld [vmem:[#allocation2 + $0xf0] sm:$0xff]
        %v779 = vld [vmem:[#allocation2 + $0xf8] sm:$0xff]
        %v780 = vld [vmem:[%s249] sm:$0x1]
        %v782 = vlaneseq
        %v783 = vshrl.u32 %v782, 7
        %v784 = vsub.s32 0, %v783
        %v785 = vrot.slane %v780, %v784
        %v787 = vadd.f32 %v748, %v785
        %v788 = vadd.f32 %v749, %v785
        %v789 = vadd.f32 %v750, %v785
        %v790 = vadd.f32 %v751, %v785
        %v791 = vadd.f32 %v752, %v785
        %v792 = vadd.f32 %v753, %v785
        %v793 = vadd.f32 %v754, %v785
        %v794 = vadd.f32 %v755, %v785
        %v795 = vadd.f32 %v756, %v785
        %v796 = vadd.f32 %v757, %v785
        %v797 = vadd.f32 %v758, %v785
        %v798 = vadd.f32 %v759, %v785
        %v799 = vadd.f32 %v760, %v785
        %v800 = vadd.f32 %v761, %v785
        %v801 = vadd.f32 %v762, %v785
        %v802 = vadd.f32 %v763, %v785
        %v803 = vadd.f32 %v764, %v785
        %v804 = vadd.f32 %v765, %v785
        %v805 = vadd.f32 %v766, %v785
        %v806 = vadd.f32 %v767, %v785
        %v807 = vadd.f32 %v768, %v785
        %v808 = vadd.f32 %v769, %v785
        %v809 = vadd.f32 %v770, %v785
        %v810 = vadd.f32 %v771, %v785
        %v811 = vadd.f32 %v772, %v785
        %v812 = vadd.f32 %v773, %v785
        %v813 = vadd.f32 %v774, %v785
        %v814 = vadd.f32 %v775, %v785
        %v815 = vadd.f32 %v776, %v785
        %v816 = vadd.f32 %v777, %v785
        %v817 = vadd.f32 %v778, %v785
        %v818 = vadd.f32 %v779, %v785
        %v819 = vmax.f32 %v787, 0.0
        %v820 = vmax.f32 %v788, 0.0
        %v821 = vmax.f32 %v789, 0.0
        %v822 = vmax.f32 %v790, 0.0
        %v823 = vmax.f32 %v791, 0.0
        %v824 = vmax.f32 %v792, 0.0
        %v825 = vmax.f32 %v793, 0.0
        %v826 = vmax.f32 %v794, 0.0
        %v827 = vmax.f32 %v795, 0.0
        %v828 = vmax.f32 %v796, 0.0
        %v829 = vmax.f32 %v797, 0.0
        %v830 = vmax.f32 %v798, 0.0
        %v831 = vmax.f32 %v799, 0.0
        %v832 = vmax.f32 %v800, 0.0
        %v833 = vmax.f32 %v801, 0.0
        %v834 = vmax.f32 %v802, 0.0
        %v835 = vmax.f32 %v803, 0.0
        %v836 = vmax.f32 %v804, 0.0
        %v837 = vmax.f32 %v805, 0.0
        %v838 = vmax.f32 %v806, 0.0
        %v839 = vmax.f32 %v807, 0.0
        %v840 = vmax.f32 %v808, 0.0
        %v841 = vmax.f32 %v809, 0.0
        %v842 = vmax.f32 %v810, 0.0
        %v843 = vmax.f32 %v811, 0.0
        %v844 = vmax.f32 %v812, 0.0
        %v845 = vmax.f32 %v813, 0.0
        %v846 = vmax.f32 %v814, 0.0
        %v847 = vmax.f32 %v815, 0.0
        %v848 = vmax.f32 %v816, 0.0
        %v849 = vmax.f32 %v817, 0.0
        %v850 = vmax.f32 %v818, 0.0
        %v851 = vpack.c.bf16 %v820, %v819
        %v852 = vpack.c.bf16 %v822, %v821
        %v853 = vpack.c.bf16 %v824, %v823
        %v854 = vpack.c.bf16 %v826, %v825
        %v855 = vpack.c.bf16 %v828, %v827
        %v856 = vpack.c.bf16 %v830, %v829
        %v857 = vpack.c.bf16 %v832, %v831
        %v858 = vpack.c.bf16 %v834, %v833
        %v859 = vpack.c.bf16 %v836, %v835
        %v860 = vpack.c.bf16 %v838, %v837
        %v861 = vpack.c.bf16 %v840, %v839
        %v862 = vpack.c.bf16 %v842, %v841
        %v863 = vpack.c.bf16 %v844, %v843
        %v864 = vpack.c.bf16 %v846, %v845
        %v865 = vpack.c.bf16 %v848, %v847
        %v866 = vpack.c.bf16 %v850, %v849
        %v883 = vunpack.c.l.b16 %v851
        %v884 = vunpack.c.h.b16 %v851
        %v885 = vunpack.c.l.b16 %v852
        %v886 = vunpack.c.h.b16 %v852
        %v887 = vunpack.c.l.b16 %v853
        %v888 = vunpack.c.h.b16 %v853
        %v889 = vunpack.c.l.b16 %v854
        %v890 = vunpack.c.h.b16 %v854
        %v891 = vunpack.c.l.b16 %v855
        %v892 = vunpack.c.h.b16 %v855
        %v893 = vunpack.c.l.b16 %v856
        %v894 = vunpack.c.h.b16 %v856
        %v895 = vunpack.c.l.b16 %v857
        %v896 = vunpack.c.h.b16 %v857
        %v897 = vunpack.c.l.b16 %v858
        %v898 = vunpack.c.h.b16 %v858
        %v899 = vunpack.c.l.b16 %v859
        %v900 = vunpack.c.h.b16 %v859
        %v901 = vunpack.c.l.b16 %v860
        %v902 = vunpack.c.h.b16 %v860
        %v903 = vunpack.c.l.b16 %v861
        %v904 = vunpack.c.h.b16 %v861
        %v905 = vunpack.c.l.b16 %v862
        %v906 = vunpack.c.h.b16 %v862
        %v907 = vunpack.c.l.b16 %v863
        %v908 = vunpack.c.h.b16 %v863
        %v909 = vunpack.c.l.b16 %v864
        %v910 = vunpack.c.h.b16 %v864
        %v911 = vunpack.c.l.b16 %v865
        %v912 = vunpack.c.h.b16 %v865
        %v913 = vunpack.c.l.b16 %v866
        %v914 = vunpack.c.h.b16 %v866
        %v915 = vpack.c.b16 %v883, %v883
        %v916 = vpack.c.b16 %v884, %v884
        %v917 = vpack.c.b16 %v885, %v885
        %v918 = vpack.c.b16 %v886, %v886
        %v919 = vpack.c.b16 %v887, %v887
        %v920 = vpack.c.b16 %v888, %v888
        %v921 = vpack.c.b16 %v889, %v889
        %v922 = vpack.c.b16 %v890, %v890
        %v923 = vpack.c.b16 %v891, %v891
        %v924 = vpack.c.b16 %v892, %v892
        %v925 = vpack.c.b16 %v893, %v893
        %v926 = vpack.c.b16 %v894, %v894
        %v927 = vpack.c.b16 %v895, %v895
        %v928 = vpack.c.b16 %v896, %v896
        %v929 = vpack.c.b16 %v897, %v897
        %v930 = vpack.c.b16 %v898, %v898
        %v931 = vpack.c.b16 %v899, %v899
        %v932 = vpack.c.b16 %v900, %v900
        %v933 = vpack.c.b16 %v901, %v901
        %v934 = vpack.c.b16 %v902, %v902
        %v935 = vpack.c.b16 %v903, %v903
        %v936 = vpack.c.b16 %v904, %v904
        %v937 = vpack.c.b16 %v905, %v905
        %v938 = vpack.c.b16 %v906, %v906
        %v939 = vpack.c.b16 %v907, %v907
        %v940 = vpack.c.b16 %v908, %v908
        %v941 = vpack.c.b16 %v909, %v909
        %v942 = vpack.c.b16 %v910, %v910
        %v943 = vpack.c.b16 %v911, %v911
        %v944 = vpack.c.b16 %v912, %v912
        %v945 = vpack.c.b16 %v913, %v913
        %v946 = vpack.c.b16 %v914, %v914
        %979 = vst [vmem:[%s257] sm:$0xf] %v915
        %980 = vst [vmem:[%s257 + $0x4] sm:$0xf] %v916
        %981 = vst [vmem:[%s257 + $0x8] sm:$0xf] %v917
        %982 = vst [vmem:[%s257 + $0xc] sm:$0xf] %v918
        %983 = vst [vmem:[%s257 + $0x10] sm:$0xf] %v919
        %984 = vst [vmem:[%s257 + $0x14] sm:$0xf] %v920
        %985 = vst [vmem:[%s257 + $0x18] sm:$0xf] %v921
        %986 = vst [vmem:[%s257 + $0x1c] sm:$0xf] %v922
        %987 = vst [vmem:[%s257 + $0x20] sm:$0xf] %v923
        %988 = vst [vmem:[%s257 + $0x24] sm:$0xf] %v924
        %989 = vst [vmem:[%s257 + $0x28] sm:$0xf] %v925
        %990 = vst [vmem:[%s257 + $0x2c] sm:$0xf] %v926
        %991 = vst [vmem:[%s257 + $0x30] sm:$0xf] %v927
        %992 = vst [vmem:[%s257 + $0x34] sm:$0xf] %v928
        %993 = vst [vmem:[%s257 + $0x38] sm:$0xf] %v929
        %994 = vst [vmem:[%s257 + $0x3c] sm:$0xf] %v930
        %995 = vst [vmem:[%s257 + $0x40] sm:$0xf] %v931
        %996 = vst [vmem:[%s257 + $0x44] sm:$0xf] %v932
        %997 = vst [vmem:[%s257 + $0x48] sm:$0xf] %v933
        %998 = vst [vmem:[%s257 + $0x4c] sm:$0xf] %v934
        %999 = vst [vmem:[%s257 + $0x50] sm:$0xf] %v935
        %1000 = vst [vmem:[%s257 + $0x54] sm:$0xf] %v936
        %1001 = vst [vmem:[%s257 + $0x58] sm:$0xf] %v937
        %1002 = vst [vmem:[%s257 + $0x5c] sm:$0xf] %v938
        %1003 = vst [vmem:[%s257 + $0x60] sm:$0xf] %v939
        %1004 = vst [vmem:[%s257 + $0x64] sm:$0xf] %v940
        %1005 = vst [vmem:[%s257 + $0x68] sm:$0xf] %v941
        %1006 = vst [vmem:[%s257 + $0x6c] sm:$0xf] %v942
        %1007 = vst [vmem:[%s257 + $0x70] sm:$0xf] %v943
        %1008 = vst [vmem:[%s257 + $0x74] sm:$0xf] %v944
        %1009 = vst [vmem:[%s257 + $0x78] sm:$0xf] %v945
        %1010 = vst [vmem:[%s257 + $0x7c] sm:$0xf] %v946
      $region40: #{bottleneck_forward.3} parent=31 // pred_fallthru
        _
      %s1011 = smul.u32 32, %s19
      %p1012 = scmp.lt.s32.totalorder %s1011, 63
      %s1013 = scalar_select %p1012, %s1011, 63
      %p1014 = scmp.lt.s32.totalorder %s20, 0
      %s1015 = scalar_select %p1014, %s20, 0
      %s1016 = sadd.s32 %s1015, %s1013
      %s1017 = smul.addr %s1016, 4
      %s1018 = scalar_lea.vmem %s3, %s1017
      // Predicated region
      $region41: #{bottleneck_forward.3} parent=31 // pred_check
        %p1019 = pneg %p135
      $region42: #{bottleneck_forward.3} parent=31 // pred_check_branch
        %1021 = sbr.rel (%p1019) target = $region44
      $region43: #{bottleneck_forward.3} parent=31 // pred_region
        %s1022 = smul.u32 32, %s19
      $region44: #{bottleneck_forward.3} parent=31 // pred_fallthru
        _
    $region32: #{bottleneck_forward.3} parent=5 // pred_fallthru
      _
    %p1023 = scmp.le.s32.totalorder 2, %s9
    // Predicated region
    $region45: #{bottleneck_forward.3} parent=5 // pred_check
      %p1024 = pneg %p1023
    $region46: #{bottleneck_forward.3} parent=5 // pred_check_branch
      %1026 = sbr.rel (%p1024) target = $region48
    $region47: #{bottleneck_forward.3} parent=5 // pred_region
      %s1027 = ssub.s32 %s9, 2
      // Predicated region
      $region49: #{bottleneck_forward.3} parent=47 // pred_check
        %p1028 = pneg %p141
      $region50: #{bottleneck_forward.3} parent=47 // pred_check_branch
        %1030 = sbr.rel (%p1028) target = $region52
      $region51: #{bottleneck_forward.3} parent=47 // pred_region
        %s1031 = smul.u32 32, %s22
        %p1032 = scmp.lt.s32.totalorder %s1031, 63
        %s1033 = scalar_select %p1032, %s1031, 63
        %p1034 = scmp.lt.s32.totalorder %s23, 0
        %s1035 = scalar_select %p1034, %s23, 0
        %s1036 = sadd.s32 %s1035, %s1033
        %s1037 = smul.addr %s1036, 4
        %s1038 = scalar_lea.vmem %s3, %s1037
      $region52: #{bottleneck_forward.3} parent=47 // pred_fallthru
        _
    $region48: #{bottleneck_forward.3} parent=5 // pred_fallthru
      _
  $region6: #{bottleneck_forward.3} parent=0 // loop_footer
    %s13 = sadd.s32 1, %s9
  $region7: #{bottleneck_forward.3} parent=0 // loop_footer_branch
    %8 = sbr.rel target = $region3
  $region8: #{bottleneck_forward.3} parent=0 // loop_exit
    _

// kernel: bottleneck_forward.4
$region0: #{bottleneck_forward.4}
  #allocation0 [shape = 'u32[]', space=smem, size = 0x4, offset = 0x4, fixed_abs, tag = 'smem constant byte address 0x4 - core index']
  #allocation1 [shape = 'u32[144,128]{1,0:T(1,128)}', space=vmem, size = 0x12000, scoped, tag = 'internal scratch']
  %s0 = inlined_call_operand.vmem [shape: bf16[2,10,10,512], index: 0, kind: input, shape index: {}]
  %s1 = inlined_call_operand.vmem [shape: bf16[9,128,128], index: 1, kind: input, shape index: {}]
  %s2 = inlined_call_operand.vmem [shape: f32[1,128], index: 2, kind: input, shape index: {}]
  %s3 = inlined_call_operand.vmem [shape: bf16[2,8,8,128], index: 3, kind: output, shape index: {}]
  %s4 = sld [smem:[#allocation0]]
  $region45: #{bottleneck_forward.4} parent=0
    _
  %s6 = ssub.s32 1, %s4
  %s7 = scalar_select 0, %s6, %s4
  loop: start=0, step=1, limit=18
  $region2: #{bottleneck_forward.4} parent=0 // loop_pre_header
    _
  $region3: #{bottleneck_forward.4} parent=0 // loop_header
    %s9 = sphi 0, %s13
    %p10 = scmp.ge.s32.totalorder %s9, 18
    %s16 = sphi 0, %s28
    %s17 = sphi 0, %s24
    %s18 = sphi 0, %s16
    %s19 = sphi 0, %s17
    %s20 = sphi 0, %s18
    %s21 = sphi 0, %s19
    %s31 = sphi 0, %s33
    %s34 = sphi 0, %s31
    %s35 = sphi 0, %s34
    %s51 = sphi 0, %s35
    %s55 = sphi 0, %s55
    %s57 = sphi 0, %s55
    %s58 = sphi 0, %s57
    %s72 = sphi 0, %s58
    %s76 = sphi 0, %s76
    %s78 = sphi 0, %s76
    %s79 = sphi 0, %s78
    %s93 = sphi 0, %s79
    %s101 = sphi 0, %s103
    %s104 = sphi 0, %s101
    %s105 = sphi 0, %s104
    %s121 = sphi 0, %s105
  $region4: #{bottleneck_forward.4} parent=0 // loop_header_branch
    %12 = sbr.rel (%p10) target = $region8
  $region5: #{bottleneck_forward.4} parent=0 // loop_body
    %s14 = ssub.s32 %s9, 1
    %s15 = ssub.s32 %s9, 2
    %s22 = sadd.s32 1, %s17
    %p23 = scmp.ge.s32.totalorder %s22, 8
    %s24 = scalar_select %p23, 0, %s22
    %s25 = sadd.s32 1, %s16
    %s26 = scalar_select %p23, %s25, %s16
    %p27 = scmp.ge.s32.totalorder %s26, 2
    %s28 = scalar_select %p27, 0, %s26
    %s29 = ssub.s32 %s16, %s28
    %p30 = scmp.eq.s32.totalorder %s29, 0
    %s32 = sadd.s32 %s31, 1
    %s33 = scalar_select %p30, %s31, %s32
    %p36 = pneg %p30
    %p37 = scmp.eq.s32.totalorder %s9, 15
    %p38 = por %p36, %p37
    %p39 = scmp.ne.s32.totalorder %s31, %s34
    %p40 = scmp.eq.s32.totalorder %s9, 0
    %p41 = por %p39, %p40
    %p42 = scmp.ne.s32.totalorder %s31, %s34
    %p43 = scmp.eq.s32.totalorder %s14, 15
    %p44 = por %p42, %p43
    %p45 = scmp.ne.s32.totalorder %s34, %s35
    %p46 = scmp.eq.s32.totalorder %s14, 0
    %p47 = por %p45, %p46
    %p48 = scmp.ne.s32.totalorder %s34, %s35
    %p49 = scmp.eq.s32.totalorder %s15, 15
    %p50 = por %p48, %p49
    %p52 = scmp.ne.s32.totalorder %s35, %s51
    %p53 = scmp.eq.s32.totalorder %s15, 0
    %p54 = por %p52, %p53
    %s56 = sadd.s32 %s55, 1
    %p59 = scmp.eq.s32.totalorder %s9, 15
    %p60 = scmp.ne.s32.totalorder %s55, %s57
    %p61 = scmp.eq.s32.totalorder %s9, 0
    %p62 = por %p60, %p61
    %p63 = scmp.ne.s32.totalorder %s55, %s57
    %p64 = scmp.eq.s32.totalorder %s14, 15
    %p65 = por %p63, %p64
    %p66 = scmp.ne.s32.totalorder %s57, %s58
    %p67 = scmp.eq.s32.totalorder %s14, 0
    %p68 = por %p66, %p67
    %p69 = scmp.ne.s32.totalorder %s57, %s58
    %p70 = scmp.eq.s32.totalorder %s15, 15
    %p71 = por %p69, %p70
    %p73 = scmp.ne.s32.totalorder %s58, %s72
    %p74 = scmp.eq.s32.totalorder %s15, 0
    %p75 = por %p73, %p74
    %s77 = sadd.s32 %s76, 1
    %p80 = scmp.eq.s32.totalorder %s9, 15
    %p81 = scmp.ne.s32.totalorder %s76, %s78
    %p82 = scmp.eq.s32.totalorder %s9, 0
    %p83 = por %p81, %p82
    %p84 = scmp.ne.s32.totalorder %s76, %s78
    %p85 = scmp.eq.s32.totalorder %s14, 15
    %p86 = por %p84, %p85
    %p87 = scmp.ne.s32.totalorder %s78, %s79
    %p88 = scmp.eq.s32.totalorder %s14, 0
    %p89 = por %p87, %p88
    %p90 = scmp.ne.s32.totalorder %s78, %s79
    %p91 = scmp.eq.s32.totalorder %s15, 15
    %p92 = por %p90, %p91
    %p94 = scmp.ne.s32.totalorder %s79, %s93
    %p95 = scmp.eq.s32.totalorder %s15, 0
    %p96 = por %p94, %p95
    %s97 = ssub.s32 %s16, %s28
    %s98 = ssub.s32 %s17, %s24
    %s99 = sor.u32 %s97, %s98
    %p100 = scmp.eq.s32.totalorder %s99, 0
    %s102 = sadd.s32 %s101, 1
    %s103 = scalar_select %p100, %s101, %s102
    %p106 = pneg %p100
    %p107 = scmp.eq.s32.totalorder %s9, 15
    %p108 = por %p106, %p107
    %p109 = scmp.ne.s32.totalorder %s101, %s104
    %p110 = scmp.eq.s32.totalorder %s9, 0
    %p111 = por %p109, %p110
    %p112 = scmp.ne.s32.totalorder %s101, %s104
    %p113 = scmp.eq.s32.totalorder %s14, 15
    %p114 = por %p112, %p113
    %p115 = scmp.ne.s32.totalorder %s104, %s105
    %p116 = scmp.eq.s32.totalorder %s14, 0
    %p117 = por %p115, %p116
    %p118 = scmp.ne.s32.totalorder %s104, %s105
    %p119 = scmp.eq.s32.totalorder %s15, 15
    %p120 = por %p118, %p119
    %p122 = scmp.ne.s32.totalorder %s105, %s121
    %p123 = scmp.eq.s32.totalorder %s15, 0
    %p124 = por %p122, %p123
    %p125 = scmp.le.s32.totalorder 1, %s9
    %p126 = scmp.lt.s32.totalorder %s9, 17
    %p127 = pnand %p125, %p126
    %p128 = pneg %p127
    // Predicated region
    $region9: #{bottleneck_forward.4} parent=5 // pred_check
      _
    $region10: #{bottleneck_forward.4} parent=5 // pred_check_branch
      %130 = sbr.rel (%p127) target = $region12
    $region11: #{bottleneck_forward.4} parent=5 // pred_region
      %s131 = ssub.s32 %s9, 1
      // Predicated region
      $region13: #{bottleneck_forward.4} parent=11 // pred_check
        %p132 = pneg %p68
      $region14: #{bottleneck_forward.4} parent=11 // pred_check_branch
        %134 = sbr.rel (%p132) target = $region16
      $region15: #{bottleneck_forward.4} parent=11 // pred_region
        _
      $region16: #{bottleneck_forward.4} parent=11 // pred_fallthru
        _
      // Predicated region
      $region17: #{bottleneck_forward.4} parent=11 // pred_check
        %p135 = pneg %p89
      $region18: #{bottleneck_forward.4} parent=11 // pred_check_branch
        %137 = sbr.rel (%p135) target = $region20
      $region19: #{bottleneck_forward.4} parent=11 // pred_region
        _
      $region20: #{bottleneck_forward.4} parent=11 // pred_fallthru
        _
    $region12: #{bottleneck_forward.4} parent=5 // pred_fallthru
      _
    %p138 = scmp.lt.s32.totalorder %s9, 16
    // Predicated region
    $region21: #{bottleneck_forward.4} parent=5 // pred_check
      %p139 = pneg %p138
    $region22: #{bottleneck_forward.4} parent=5 // pred_check_branch
      %141 = sbr.rel (%p139) target = $region24
    $region23: #{bottleneck_forward.4} parent=5 // pred_region
      // Predicated region
      $region25: #{bottleneck_forward.4} parent=23 // pred_check
        %p142 = pneg %p41
      $region26: #{bottleneck_forward.4} parent=23 // pred_check_branch
        %144 = sbr.rel (%p142) target = $region28
      $region27: #{bottleneck_forward.4} parent=23 // pred_region
        %p145 = scmp.lt.s32.totalorder %s16, 1
        %s146 = scalar_select %p145, %s16, 1
        %s147 = smul.addr %s146, 80
        %s148 = smul.addr %s147, 4
        %s149 = scalar_lea.vmem %s0, %s148
      $region28: #{bottleneck_forward.4} parent=23 // pred_fallthru
        _
    $region24: #{bottleneck_forward.4} parent=5 // pred_fallthru
      _
    %p150 = scmp.le.s32.totalorder 1, %s9
    %p151 = scmp.lt.s32.totalorder %s9, 17
    %p152 = pnand %p150, %p151
    %p153 = pneg %p152
    // Predicated region
    $region29: #{bottleneck_forward.4} parent=5 // pred_check
      _
    $region30: #{bottleneck_forward.4} parent=5 // pred_check_branch
      %155 = sbr.rel (%p152) target = $region32
    $region31: #{bottleneck_forward.4} parent=5 // pred_region
      %s156 = ssub.s32 %s9, 1
      %p157 = scmp.lt.s32.totalorder %s18, 1
      %s158 = scalar_select %p157, %s18, 1
      %s159 = smul.addr %s158, 80
      %s160 = smul.addr %s159, 4
      %s161 = scalar_lea.vmem %s0, %s160
      %p162 = pneg %p47
      %p163 = pneg %p44
      %p164 = pneg %p68
      %p165 = pneg %p65
      %p166 = pneg %p89
      %p167 = pneg %p86
      %p168 = pneg %p117
      %p169 = pneg %p114
      %p170 = scmp.lt.s32.totalorder %s18, 1
      %s171 = scalar_select %p170, %s18, 1
      %p172 = scmp.lt.s32.totalorder %s19, 7
      %s173 = scalar_select %p172, %s19, 7
      %s174 = smul.addr %s171, 8
      %s175 = sadd.s32 %s173, %s174
      %s176 = smul.addr %s175, 4
      %s177 = scalar_lea.vmem %s3, %s176
      %p178 = scmp.lt.s32.totalorder %s18, 1
      %s179 = scalar_select %p178, %s18, 1
      %s180 = smul.addr %s179, 80
      %s181 = smul.addr %s180, 4
      %s182 = scalar_lea.vmem %s0, %s181
      %p183 = scmp.lt.s32.totalorder %s18, 1
      %s184 = scalar_select %p183, %s18, 1
      %p185 = scmp.lt.s32.totalorder %s19, 7
      %s186 = scalar_select %p185, %s19, 7
      %s187 = smul.addr %s184, 8
      %s188 = sadd.s32 %s186, %s187
      %s189 = smul.addr %s188, 4
      %s190 = scalar_lea.vmem %s3, %s189
      %s192 = smul.u32 %s19, 8
      %s193 = smul.addr %s192, 4
      %s194 = scalar_lea.vmem %s182, %s193
      %v195 = vld [vmem:[%s194] sm:$0xf]
      %v196 = vld [vmem:[%s1] sm:$0xf]
      %v197 = vld [vmem:[%s1 + $0x4] sm:$0xf]
      %v198 = vld [vmem:[%s1 + $0x8] sm:$0xf]
      %v199 = vld [vmem:[%s1 + $0xc] sm:$0xf]
      %v200 = vld [vmem:[%s1 + $0x10] sm:$0xf]
      %v201 = vld [vmem:[%s1 + $0x14] sm:$0xf]
      %v202 = vld [vmem:[%s1 + $0x18] sm:$0xf]
      %v203 = vld [vmem:[%s1 + $0x1c] sm:$0xf]
      %v204 = vld [vmem:[%s1 + $0x20] sm:$0xf]
      %v205 = vld [vmem:[%s1 + $0x24] sm:$0xf]
      %v206 = vld [vmem:[%s1 + $0x28] sm:$0xf]
      %v207 = vld [vmem:[%s1 + $0x2c] sm:$0xf]
      %v208 = vld [vmem:[%s1 + $0x30] sm:$0xf]
      %v209 = vld [vmem:[%s1 + $0x34] sm:$0xf]
      %v210 = vld [vmem:[%s1 + $0x38] sm:$0xf]
      %v211 = vld [vmem:[%s1 + $0x3c] sm:$0xf]
      %v212 = vld [vmem:[%s194 + $0x4] sm:$0xf]
      %s213 = scalar_lea.vmem %s1, 64
      %v214 = vld [vmem:[%s213] sm:$0xf]
      %v215 = vld [vmem:[%s213 + $0x4] sm:$0xf]
      %v216 = vld [vmem:[%s213 + $0x8] sm:$0xf]
      %v217 = vld [vmem:[%s213 + $0xc] sm:$0xf]
      %v218 = vld [vmem:[%s213 + $0x10] sm:$0xf]
      %v219 = vld [vmem:[%s213 + $0x14] sm:$0xf]
      %v220 = vld [vmem:[%s213 + $0x18] sm:$0xf]
      %v221 = vld [vmem:[%s213 + $0x1c] sm:$0xf]
      %v222 = vld [vmem:[%s213 + $0x20] sm:$0xf]
      %v223 = vld [vmem:[%s213 + $0x24] sm:$0xf]
      %v224 = vld [vmem:[%s213 + $0x28] sm:$0xf]
      %v225 = vld [vmem:[%s213 + $0x2c] sm:$0xf]
      %v226 = vld [vmem:[%s213 + $0x30] sm:$0xf]
      %v227 = vld [vmem:[%s213 + $0x34] sm:$0xf]
      %v228 = vld [vmem:[%s213 + $0x38] sm:$0xf]
      %v229 = vld [vmem:[%s213 + $0x3c] sm:$0xf]
      %v246 = vunpack.c.l.b16 %v214
      %v247 = vunpack.c.l.b16 %v215
      %v248 = vunpack.c.l.b16 %v216
      %v249 = vunpack.c.l.b16 %v217
      %v250 = vunpack.c.l.b16 %v218
      %v251 = vunpack.c.l.b16 %v219
      %v252 = vunpack.c.l.b16 %v220
      %v253 = vunpack.c.l.b16 %v221
      %v254 = vunpack.c.l.b16 %v222
      %v255 = vunpack.c.l.b16 %v223
      %v256 = vunpack.c.l.b16 %v224
      %v257 = vunpack.c.l.b16 %v225
      %v258 = vunpack.c.l.b16 %v226
      %v259 = vunpack.c.l.b16 %v227
      %v260 = vunpack.c.l.b16 %v228
      %v261 = vunpack.c.l.b16 %v229
      %v262 = vpack.c.b16 %v247, %v246
      %v263 = vpack.c.b16 %v249, %v248
      %v264 = vpack.c.b16 %v251, %v250
      %v265 = vpack.c.b16 %v253, %v252
      %v266 = vpack.c.b16 %v255, %v254
      %v267 = vpack.c.b16 %v257, %v256
      %v268 = vpack.c.b16 %v259, %v258
      %v269 = vpack.c.b16 %v261, %v260
      %278 = vmatprep.subr.bf16.mxu0 0
      %279 = vmatpush1.bf16.msra.mxu0 %v269
      %280 = vmatprep.subr.bf16.mxu0 0
      %281 = vmatpush1.bf16.msra.mxu0 %v268
      %282 = vmatprep.subr.bf16.mxu0 0
      %283 = vmatpush1.bf16.msra.mxu0 %v267
      %284 = vmatprep.subr.bf16.mxu0 0
      %285 = vmatpush1.bf16.msra.mxu0 %v266
      %286 = vmatprep.subr.bf16.mxu0 0
      %287 = vmatpush1.bf16.msra.mxu0 %v265
      %288 = vmatprep.subr.bf16.mxu0 0
      %289 = vmatpush1.bf16.msra.mxu0 %v264
      %290 = vmatprep.subr.bf16.mxu0 0
      %291 = vmatpush1.bf16.msra.mxu0 %v263
      %292 = vmatprep.subr.bf16.mxu0 0
      %293 = vmatpush1.bf16.msra.mxu0 %v262
      %294 = vmatprep.subr.bf16.mxu0 0
      %295 = vmatpush2.bf16.msra.mxu0 0
      %296 = vmatprep.subr.bf16.mxu0 0
      %297 = vmatpush2.bf16.msra.mxu0 0
      %298 = vmatprep.subr.bf16.mxu0 0
      %299 = vmatpush2.bf16.msra.mxu0 0
      %300 = vmatprep.subr.bf16.mxu0 0
      %301 = vmatpush2.bf16.msra.mxu0 0
      %302 = vmatprep.subr.bf16.mxu0 0
      %303 = vmatpush2.bf16.msra.mxu0 0
      %304 = vmatprep.subr.bf16.mxu0 0
      %305 = vmatpush2.bf16.msra.mxu0 0
      %306 = vmatprep.subr.bf16.mxu0 0
      %307 = vmatpush2.bf16.msra.mxu0 0
      %308 = vmatprep.subr.bf16.mxu0 0
      %309 = vmatpush2.bf16.msra.mxu0 0
      %310 = vmatprep.mubr.bf16.mxu0 0
      %311 = vmatmul.mubr.bf16.gmra.mxu0 %v212
      %v312 = vpop.f32.mrf.mxu0
      %v313 = vadd.f32 0.0, %v312
      %v314 = vpop.f32.mrf.mxu0
      %v315 = vpop.f32.mrf.mxu0
      %v316 = vpop.f32.mrf.mxu0
      %317 = vdwg.mxu0
      %v334 = vunpack.c.l.b16 %v196
      %v335 = vunpack.c.l.b16 %v197
      %v336 = vunpack.c.l.b16 %v198
      %v337 = vunpack.c.l.b16 %v199
      %v338 = vunpack.c.l.b16 %v200
      %v339 = vunpack.c.l.b16 %v201
      %v340 = vunpack.c.l.b16 %v202
      %v341 = vunpack.c.l.b16 %v203
      %v342 = vunpack.c.l.b16 %v204
      %v343 = vunpack.c.l.b16 %v205
      %v344 = vunpack.c.l.b16 %v206
      %v345 = vunpack.c.l.b16 %v207
      %v346 = vunpack.c.l.b16 %v208
      %v347 = vunpack.c.l.b16 %v209
      %v348 = vunpack.c.l.b16 %v210
      %v349 = vunpack.c.l.b16 %v211
      %v350 = vpack.c.b16 %v335, %v334
      %v351 = vpack.c.b16 %v337, %v336
      %v352 = vpack.c.b16 %v339, %v338
      %v353 = vpack.c.b16 %v341, %v340
      %v354 = vpack.c.b16 %v343, %v342
      %v355 = vpack.c.b16 %v345, %v344
      %v356 = vpack.c.b16 %v347, %v346
      %v357 = vpack.c.b16 %v349, %v348
      %366 = vmatprep.subr.bf16.mxu0 0
      %367 = vmatpush1.bf16.msra.mxu0 %v357
      %368 = vmatprep.subr.bf16.mxu0 0
      %369 = vmatpush1.bf16.msra.mxu0 %v356
      %370 = vmatprep.subr.bf16.mxu0 0
      %371 = vmatpush1.bf16.msra.mxu0 %v355
      %372 = vmatprep.subr.bf16.mxu0 0
      %373 = vmatpush1.bf16.msra.mxu0 %v354
      %374 = vmatprep.subr.bf16.mxu0 0
      %375 = vmatpush1.bf16.msra.mxu0 %v353
      %376 = vmatprep.subr.bf16.mxu0 0
      %377 = vmatpush1.bf16.msra.mxu0 %v352
      %378 = vmatprep.subr.bf16.mxu0 0
      %379 = vmatpush1.bf16.msra.mxu0 %v351
      %380 = vmatprep.subr.bf16.mxu0 0
      %381 = vmatpush1.bf16.msra.mxu0 %v350
      %382 = vmatprep.subr.bf16.mxu0 0
      %383 = vmatpush2.bf16.msra.mxu0 0
      %384 = vmatprep.subr.bf16.mxu0 0
      %385 = vmatpush2.bf16.msra.mxu0 0
      %386 = vmatprep.subr.bf16.mxu0 0
      %387 = vmatpush2.bf16.msra.mxu0 0
      %388 = vmatprep.subr.bf16.mxu0 0
      %389 = vmatpush2.bf16.msra.mxu0 0
      %390 = vmatprep.subr.bf16.mxu0 0
      %391 = vmatpush2.bf16.msra.mxu0 0
      %392 = vmatprep.subr.bf16.mxu0 0
      %393 = vmatpush2.bf16.msra.mxu0 0
      %394 = vmatprep.subr.bf16.mxu0 0
      %395 = vmatpush2.bf16.msra.mxu0 0
      %396 = vmatprep.subr.bf16.mxu0 0
      %397 = vmatpush2.bf16.msra.mxu0 0
      %398 = vmatprep.mubr.bf16.mxu0 0
      %399 = vmatmul.mubr.bf16.gmra.mxu0 %v195
      %v400 = vpop.f32.mrf.mxu0
      %v401 = vadd.f32 %v313, %v400
      %v402 = vpop.f32.mrf.mxu0
      %v403 = vpop.f32.mrf.mxu0
      %v404 = vpop.f32.mrf.mxu0
      %405 = vdwg.mxu0
      %v406 = vld [vmem:[%s194] sm:$0xf]
      %v407 = vld [vmem:[%s194 + $0x10] sm:$0x1]
      %s408 = scalar_lea.vmem %s1, 128
      %v409 = vld [vmem:[%s408] sm:$0xf]
      %v410 = vld [vmem:[%s408 + $0x4] sm:$0xf]
      %v411 = vld [vmem:[%s408 + $0x8] sm:$0xf]
      %v412 = vld [vmem:[%s408 + $0xc] sm:$0xf]
      %v413 = vld [vmem:[%s408 + $0x10] sm:$0xf]
      %v414 = vld [vmem:[%s408 + $0x14] sm:$0xf]
      %v415 = vld [vmem:[%s408 + $0x18] sm:$0xf]
      %v416 = vld [vmem:[%s408 + $0x1c] sm:$0xf]
      %v417 = vld [vmem:[%s408 + $0x20] sm:$0xf]
      %v418 = vld [vmem:[%s408 + $0x24] sm:$0xf]
      %v419 = vld [vmem:[%s408 + $0x28] sm:$0xf]
      %v420 = vld [vmem:[%s408 + $0x2c] sm:$0xf]
      %v421 = vld [vmem:[%s408 + $0x30] sm:$0xf]
      %v422 = vld [vmem:[%s408 + $0x34] sm:$0xf]
      %v423 = vld [vmem:[%s408 + $0x38] sm:$0xf]
      %v424 = vld [vmem:[%s408 + $0x3c] sm:$0xf]
      %v427 = vunpack.c.l.b16 %v406
      %v428 = vunpack.c.l.b16 %v407
      %v429 = vpack.c.b16 %v428, %v427
      %v431 = vshrl.u32 %v429, 16
      %v433 = vshll.u32 %v429, 16
      %v435 = vrot.slane %v433, 1
      %v436 = vor.u32 %v431, %v435
      %v454 = vunpack.c.l.b16 %v409
      %v455 = vunpack.c.l.b16 %v410
      %v456 = vunpack.c.l.b16 %v411
      %v457 = vunpack.c.l.b16 %v412
      %v458 = vunpack.c.l.b16 %v413
      %v459 = vunpack.c.l.b16 %v414
      %v460 = vunpack.c.l.b16 %v415
      %v461 = vunpack.c.l.b16 %v416
      %v462 = vunpack.c.l.b16 %v417
      %v463 = vunpack.c.l.b16 %v418
      %v464 = vunpack.c.l.b16 %v419
      %v465 = vunpack.c.l.b16 %v420
      %v466 = vunpack.c.l.b16 %v421
      %v467 = vunpack.c.l.b16 %v422
      %v468 = vunpack.c.l.b16 %v423
      %v469 = vunpack.c.l.b16 %v424
      %v470 = vpack.c.b16 %v455, %v454
      %v471 = vpack.c.b16 %v457, %v456
      %v472 = vpack.c.b16 %v459, %v458
      %v473 = vpack.c.b16 %v461, %v460
      %v474 = vpack.c.b16 %v463, %v462
      %v475 = vpack.c.b16 %v465, %v464
      %v476 = vpack.c.b16 %v467, %v466
      %v477 = vpack.c.b16 %v469, %v468
      %486 = vmatprep.subr.bf16.mxu0 0
      %487 = vmatpush1.bf16.msra.mxu0 %v477
      %488 = vmatprep.subr.bf16.mxu0 0
      %489 = vmatpush1.bf16.msra.mxu0 %v476
      %490 = vmatprep.subr.bf16.mxu0 0
      %491 = vmatpush1.bf16.msra.mxu0 %v475
      %492 = vmatprep.subr.bf16.mxu0 0
      %493 = vmatpush1.bf16.msra.mxu0 %v474
      %494 = vmatprep.subr.bf16.mxu0 0
      %495 = vmatpush1.bf16.msra.mxu0 %v473
      %496 = vmatprep.subr.bf16.mxu0 0
      %497 = vmatpush1.bf16.msra.mxu0 %v472
      %498 = vmatprep.subr.bf16.mxu0 0
      %499 = vmatpush1.bf16.msra.mxu0 %v471
      %500 = vmatprep.subr.bf16.mxu0 0
      %501 = vmatpush1.bf16.msra.mxu0 %v470
      %502 = vmatprep.subr.bf16.mxu0 0
      %503 = vmatpush2.bf16.msra.mxu0 0
      %504 = vmatprep.subr.bf16.mxu0 0
      %505 = vmatpush2.bf16.msra.mxu0 0
      %506 = vmatprep.subr.bf16.mxu0 0
      %507 = vmatpush2.bf16.msra.mxu0 0
      %508 = vmatprep.subr.bf16.mxu0 0
      %509 = vmatpush2.bf16.msra.mxu0 0
      %510 = vmatprep.subr.bf16.mxu0 0
      %511 = vmatpush2.bf16.msra.mxu0 0
      %512 = vmatprep.subr.bf16.mxu0 0
      %513 = vmatpush2.bf16.msra.mxu0 0
      %514 = vmatprep.subr.bf16.mxu0 0
      %515 = vmatpush2.bf16.msra.mxu0 0
      %516 = vmatprep.subr.bf16.mxu0 0
      %517 = vmatpush2.bf16.msra.mxu0 0
      %518 = vmatprep.mubr.bf16.mxu0 0
      %519 = vmatmul.mubr.bf16.gmra.mxu0 %v436
      %v520 = vpop.f32.mrf.mxu0
      %v521 = vadd.f32 0.0, %v520
      %v522 = vpop.f32.mrf.mxu0
      %v523 = vpop.f32.mrf.mxu0
      %v524 = vpop.f32.mrf.mxu0
      %525 = vdwg.mxu0
      %v526 = vadd.f32 %v401, %v521
      %v527 = vld [vmem:[%s194 + $0x8] sm:$0xf]
      %s528 = scalar_lea.vmem %s1, 192
      %v529 = vld [vmem:[%s528] sm:$0xf]
      %v530 = vld [vmem:[%s528 + $0x4] sm:$0xf]
      %v531 = vld [vmem:[%s528 + $0x8] sm:$0xf]
      %v532 = vld [vmem:[%s528 + $0xc] sm:$0xf]
      %v533 = vld [vmem:[%s528 + $0x10] sm:$0xf]
      %v534 = vld [vmem:[%s528 + $0x14] sm:$0xf]
      %v535 = vld [vmem:[%s528 + $0x18] sm:$0xf]
      %v536 = vld [vmem:[%s528 + $0x1c] sm:$0xf]
      %v537 = vld [vmem:[%s528 + $0x20] sm:$0xf]
      %v538 = vld [vmem:[%s528 + $0x24] sm:$0xf]
      %v539 = vld [vmem:[%s528 + $0x28] sm:$0xf]
      %v540 = vld [vmem:[%s528 + $0x2c] sm:$0xf]
      %v541 = vld [vmem:[%s528 + $0x30] sm:$0xf]
      %v542 = vld [vmem:[%s528 + $0x34] sm:$0xf]
      %v543 = vld [vmem:[%s528 + $0x38] sm:$0xf]
      %v544 = vld [vmem:[%s528 + $0x3c] sm:$0xf]
      %v561 = vunpack.c.l.b16 %v529
      %v562 = vunpack.c.l.b16 %v530
      %v563 = vunpack.c.l.b16 %v531
      %v564 = vunpack.c.l.b16 %v532
      %v565 = vunpack.c.l.b16 %v533
      %v566 = vunpack.c.l.b16 %v534
      %v567 = vunpack.c.l.b16 %v535
      %v568 = vunpack.c.l.b16 %v536
      %v569 = vunpack.c.l.b16 %v537
      %v570 = vunpack.c.l.b16 %v538
      %v571 = vunpack.c.l.b16 %v539
      %v572 = vunpack.c.l.b16 %v540
      %v573 = vunpack.c.l.b16 %v541
      %v574 = vunpack.c.l.b16 %v542
      %v575 = vunpack.c.l.b16 %v543
      %v576 = vunpack.c.l.b16 %v544
      %v577 = vpack.c.b16 %v562, %v561
      %v578 = vpack.c.b16 %v564, %v563
      %v579 = vpack.c.b16 %v566, %v565
      %v580 = vpack.c.b16 %v568, %v567
      %v581 = vpack.c.b16 %v570, %v569
      %v582 = vpack.c.b16 %v572, %v571
      %v583 = vpack.c.b16 %v574, %v573
      %v584 = vpack.c.b16 %v576, %v575
      %593 = vmatprep.subr.bf16.mxu0 0
      %594 = vmatpush1.bf16.msra.mxu0 %v584
      %595 = vmatprep.subr.bf16.mxu0 0
      %596 = vmatpush1.bf16.msra.mxu0 %v583
      %597 = vmatprep.subr.bf16.mxu0 0
      %598 = vmatpush1.bf16.msra.mxu0 %v582
      %599 = vmatprep.subr.bf16.mxu0 0
      %600 = vmatpush1.bf16.msra.mxu0 %v581
      %601 = vmatprep.subr.bf16.mxu0 0
      %602 = vmatpush1.bf16.msra.mxu0 %v580
      %603 = vmatprep.subr.bf16.mxu0 0
      %604 = vmatpush1.bf16.msra.mxu0 %v579
      %605 = vmatprep.subr.bf16.mxu0 0
      %606 = vmatpush1.bf16.msra.mxu0 %v578
      %607 = vmatprep.subr.bf16.mxu0 0
      %608 = vmatpush1.bf16.msra.mxu0 %v577
      %609 = vmatprep.subr.bf16.mxu0 0
      %610 = vmatpush2.bf16.msra.mxu0 0
      %611 = vmatprep.subr.bf16.mxu0 0
      %612 = vmatpush2.bf16.msra.mxu0 0
      %613 = vmatprep.subr.bf16.mxu0 0
      %614 = vmatpush2.bf16.msra.mxu0 0
      %615 = vmatprep.subr.bf16.mxu0 0
      %616 = vmatpush2.bf16.msra.mxu0 0
      %617 = vmatprep.subr.bf16.mxu0 0
      %618 = vmatpush2.bf16.msra.mxu0 0
      %619 = vmatprep.subr.bf16.mxu0 0
      %620 = vmatpush2.bf16.msra.mxu0 0
      %621 = vmatprep.subr.bf16.mxu0 0
      %622 = vmatpush2.bf16.msra.mxu0 0
      %623 = vmatprep.subr.bf16.mxu0 0
      %624 = vmatpush2.bf16.msra.mxu0 0
      %625 = vmatprep.mubr.bf16.mxu0 0
      %626 = vmatmul.mubr.bf16.gmra.mxu0 %v527
      %v627 = vpop.f32.mrf.mxu0
      %v628 = vadd.f32 0.0, %v627
      %v629 = vpop.f32.mrf.mxu0
      %v630 = vpop.f32.mrf.mxu0
      %v631 = vpop.f32.mrf.mxu0
      %632 = vdwg.mxu0
      %v633 = vadd.f32 %v526, %v628
      %v634 = vld [vmem:[%s194 + $0xc] sm:$0xf]
      %s635 = scalar_lea.vmem %s1, 256
      %v636 = vld [vmem:[%s635] sm:$0xf]
      %v637 = vld [vmem:[%s635 + $0x4] sm:$0xf]
      %v638 = vld [vmem:[%s635 + $0x8] sm:$0xf]
      %v639 = vld [vmem:[%s635 + $0xc] sm:$0xf]
      %v640 = vld [vmem:[%s635 + $0x10] sm:$0xf]
      %v641 = vld [vmem:[%s635 + $0x14] sm:$0xf]
      %v642 = vld [vmem:[%s635 + $0x18] sm:$0xf]
      %v643 = vld [vmem:[%s635 + $0x1c] sm:$0xf]
      %v644 = vld [vmem:[%s635 + $0x20] sm:$0xf]
      %v645 = vld [vmem:[%s635 + $0x24] sm:$0xf]
      %v646 = vld [vmem:[%s635 + $0x28] sm:$0xf]
      %v647 = vld [vmem:[%s635 + $0x2c] sm:$0xf]
      %v648 = vld [vmem:[%s635 + $0x30] sm:$0xf]
      %v649 = vld [vmem:[%s635 + $0x34] sm:$0xf]
      %v650 = vld [vmem:[%s635 + $0x38] sm:$0xf]
      %v651 = vld [vmem:[%s635 + $0x3c] sm:$0xf]
      %v668 = vunpack.c.l.b16 %v636
      %v669 = vunpack.c.l.b16 %v637
      %v670 = vunpack.c.l.b16 %v638
      %v671 = vunpack.c.l.b16 %v639
      %v672 = vunpack.c.l.b16 %v640
      %v673 = vunpack.c.l.b16 %v641
      %v674 = vunpack.c.l.b16 %v642
      %v675 = vunpack.c.l.b16 %v643
      %v676 = vunpack.c.l.b16 %v644
      %v677 = vunpack.c.l.b16 %v645
      %v678 = vunpack.c.l.b16 %v646
      %v679 = vunpack.c.l.b16 %v647
      %v680 = vunpack.c.l.b16 %v648
      %v681 = vunpack.c.l.b16 %v649
      %v682 = vunpack.c.l.b16 %v650
      %v683 = vunpack.c.l.b16 %v651
      %v684 = vpack.c.b16 %v669, %v668
      %v685 = vpack.c.b16 %v671, %v670
      %v686 = vpack.c.b16 %v673, %v672
      %v687 = vpack.c.b16 %v675, %v674
      %v688 = vpack.c.b16 %v677, %v676
      %v689 = vpack.c.b16 %v679, %v678
      %v690 = vpack.c.b16 %v681, %v680
      %v691 = vpack.c.b16 %v683, %v682
      %700 = vmatprep.subr.bf16.mxu0 0
      %701 = vmatpush1.bf16.msra.mxu0 %v691
      %702 = vmatprep.subr.bf16.mxu0 0
      %703 = vmatpush1.bf16.msra.mxu0 %v690
      %704 = vmatprep.subr.bf16.mxu0 0
      %705 = vmatpush1.bf16.msra.mxu0 %v689
      %706 = vmatprep.subr.bf16.mxu0 0
      %707 = vmatpush1.bf16.msra.mxu0 %v688
      %708 = vmatprep.subr.bf16.mxu0 0
      %709 = vmatpush1.bf16.msra.mxu0 %v687
      %710 = vmatprep.subr.bf16.mxu0 0
      %711 = vmatpush1.bf16.msra.mxu0 %v686
      %712 = vmatprep.subr.bf16.mxu0 0
      %713 = vmatpush1.bf16.msra.mxu0 %v685
      %714 = vmatprep.subr.bf16.mxu0 0
      %715 = vmatpush1.bf16.msra.mxu0 %v684
      %716 = vmatprep.subr.bf16.mxu0 0
      %717 = vmatpush2.bf16.msra.mxu0 0
      %718 = vmatprep.subr.bf16.mxu0 0
      %719 = vmatpush2.bf16.msra.mxu0 0
      %720 = vmatprep.subr.bf16.mxu0 0
      %721 = vmatpush2.bf16.msra.mxu0 0
      %722 = vmatprep.subr.bf16.mxu0 0
      %723 = vmatpush2.bf16.msra.mxu0 0
      %724 = vmatprep.subr.bf16.mxu0 0
      %725 = vmatpush2.bf16.msra.mxu0 0
      %726 = vmatprep.subr.bf16.mxu0 0
      %727 = vmatpush2.bf16.msra.mxu0 0
      %728 = vmatprep.subr.bf16.mxu0 0
      %729 = vmatpush2.bf16.msra.mxu0 0
      %730 = vmatprep.subr.bf16.mxu0 0
      %731 = vmatpush2.bf16.msra.mxu0 0
      %732 = vmatprep.mubr.bf16.mxu0 0
      %733 = vmatmul.mubr.bf16.gmra.mxu0 %v634
      %v734 = vpop.f32.mrf.mxu0
      %v735 = vadd.f32 0.0, %v734
      %v736 = vpop.f32.mrf.mxu0
      %v737 = vpop.f32.mrf.mxu0
      %v738 = vpop.f32.mrf.mxu0
      %739 = vdwg.mxu0
      %v740 = vadd.f32 %v633, %v735
      %v741 = vld [vmem:[%s194 + $0x8] sm:$0xf]
      %v742 = vld [vmem:[%s194 + $0x18] sm:$0x1]
      %s743 = scalar_lea.vmem %s1, 320
      %v744 = vld [vmem:[%s743] sm:$0xf]
      %v745 = vld [vmem:[%s743 + $0x4] sm:$0xf]
      %v746 = vld [vmem:[%s743 + $0x8] sm:$0xf]
      %v747 = vld [vmem:[%s743 + $0xc] sm:$0xf]
      %v748 = vld [vmem:[%s743 + $0x10] sm:$0xf]
      %v749 = vld [vmem:[%s743 + $0x14] sm:$0xf]
      %v750 = vld [vmem:[%s743 + $0x18] sm:$0xf]
      %v751 = vld [vmem:[%s743 + $0x1c] sm:$0xf]
      %v752 = vld [vmem:[%s743 + $0x20] sm:$0xf]
      %v753 = vld [vmem:[%s743 + $0x24] sm:$0xf]
      %v754 = vld [vmem:[%s743 + $0x28] sm:$0xf]
      %v755 = vld [vmem:[%s743 + $0x2c] sm:$0xf]
      %v756 = vld [vmem:[%s743 + $0x30] sm:$0xf]
      %v757 = vld [vmem:[%s743 + $0x34] sm:$0xf]
      %v758 = vld [vmem:[%s743 + $0x38] sm:$0xf]
      %v759 = vld [vmem:[%s743 + $0x3c] sm:$0xf]
      %v762 = vunpack.c.l.b16 %v741
      %v763 = vunpack.c.l.b16 %v742
      %v764 = vpack.c.b16 %v763, %v762
      %v766 = vshrl.u32 %v764, 16
      %v768 = vshll.u32 %v764, 16
      %v770 = vrot.slane %v768, 1
      %v771 = vor.u32 %v766, %v770
      %v789 = vunpack.c.l.b16 %v744
      %v790 = vunpack.c.l.b16 %v745
      %v791 = vunpack.c.l.b16 %v746
      %v792 = vunpack.c.l.b16 %v747
      %v793 = vunpack.c.l.b16 %v748
      %v794 = vunpack.c.l.b16 %v749
      %v795 = vunpack.c.l.b16 %v750
      %v796 = vunpack.c.l.b16 %v751
      %v797 = vunpack.c.l.b16 %v752
      %v798 = vunpack.c.l.b16 %v753
      %v799 = vunpack.c.l.b16 %v754
      %v800 = vunpack.c.l.b16 %v755
      %v801 = vunpack.c.l.b16 %v756
      %v802 = vunpack.c.l.b16 %v757
      %v803 = vunpack.c.l.b16 %v758
      %v804 = vunpack.c.l.b16 %v759
      %v805 = vpack.c.b16 %v790, %v789
      %v806 = vpack.c.b16 %v792, %v791
      %v807 = vpack.c.b16 %v794, %v793
      %v808 = vpack.c.b16 %v796, %v795
      %v809 = vpack.c.b16 %v798, %v797
      %v810 = vpack.c.b16 %v800, %v799
      %v811 = vpack.c.b16 %v802, %v801
      %v812 = vpack.c.b16 %v804, %v803
      %821 = vmatprep.subr.bf16.mxu0 0
      %822 = vmatpush1.bf16.msra.mxu0 %v812
      %823 = vmatprep.subr.bf16.mxu0 0
      %824 = vmatpush1.bf16.msra.mxu0 %v811
      %825 = vmatprep.subr.bf16.mxu0 0
      %826 = vmatpush1.bf16.msra.mxu0 %v810
      %827 = vmatprep.subr.bf16.mxu0 0
      %828 = vmatpush1.bf16.msra.mxu0 %v809
      %829 = vmatprep.subr.bf16.mxu0 0
      %830 = vmatpush1.bf16.msra.mxu0 %v808
      %831 = vmatprep.subr.bf16.mxu0 0
      %832 = vmatpush1.bf16.msra.mxu0 %v807
      %833 = vmatprep.subr.bf16.mxu0 0
      %834 = vmatpush1.bf16.msra.mxu0 %v806
      %835 = vmatprep.subr.bf16.mxu0 0
      %836 = vmatpush1.bf16.msra.mxu0 %v805
      %837 = vmatprep.subr.bf16.mxu0 0
      %838 = vmatpush2.bf16.msra.mxu0 0
      %839 = vmatprep.subr.bf16.mxu0 0
      %840 = vmatpush2.bf16.msra.mxu0 0
      %841 = vmatprep.subr.bf16.mxu0 0
      %842 = vmatpush2.bf16.msra.mxu0 0
      %843 = vmatprep.subr.bf16.mxu0 0
      %844 = vmatpush2.bf16.msra.mxu0 0
      %845 = vmatprep.subr.bf16.mxu0 0
      %846 = vmatpush2.bf16.msra.mxu0 0
      %847 = vmatprep.subr.bf16.mxu0 0
      %848 = vmatpush2.bf16.msra.mxu0 0
      %849 = vmatprep.subr.bf16.mxu0 0
      %850 = vmatpush2.bf16.msra.mxu0 0
      %851 = vmatprep.subr.bf16.mxu0 0
      %852 = vmatpush2.bf16.msra.mxu0 0
      %853 = vmatprep.mubr.bf16.mxu0 0
      %854 = vmatmul.mubr.bf16.gmra.mxu0 %v771
      %v855 = vpop.f32.mrf.mxu0
      %v856 = vadd.f32 0.0, %v855
      %v857 = vpop.f32.mrf.mxu0
      %v858 = vpop.f32.mrf.mxu0
      %v859 = vpop.f32.mrf.mxu0
      %860 = vdwg.mxu0
      %v861 = vadd.f32 %v740, %v856
      %s862 = sadd.s32 %s19, 1
      %s863 = smul.u32 %s862, 8
      %s864 = smul.addr %s863, 4
      %s865 = scalar_lea.vmem %s182, %s864
      %v866 = vld [vmem:[%s865] sm:$0xf]
      %s867 = scalar_lea.vmem %s1, 384
      %v868 = vld [vmem:[%s867] sm:$0xf]
      %v869 = vld [vmem:[%s867 + $0x4] sm:$0xf]
      %v870 = vld [vmem:[%s867 + $0x8] sm:$0xf]
      %v871 = vld [vmem:[%s867 + $0xc] sm:$0xf]
      %v872 = vld [vmem:[%s867 + $0x10] sm:$0xf]
      %v873 = vld [vmem:[%s867 + $0x14] sm:$0xf]
      %v874 = vld [vmem:[%s867 + $0x18] sm:$0xf]
      %v875 = vld [vmem:[%s867 + $0x1c] sm:$0xf]
      %v876 = vld [vmem:[%s867 + $0x20] sm:$0xf]
      %v877 = vld [vmem:[%s867 + $0x24] sm:$0xf]
      %v878 = vld [vmem:[%s867 + $0x28] sm:$0xf]
      %v879 = vld [vmem:[%s867 + $0x2c] sm:$0xf]
      %v880 = vld [vmem:[%s867 + $0x30] sm:$0xf]
      %v881 = vld [vmem:[%s867 + $0x34] sm:$0xf]
      %v882 = vld [vmem:[%s867 + $0x38] sm:$0xf]
      %v883 = vld [vmem:[%s867 + $0x3c] sm:$0xf]
      %v900 = vunpack.c.l.b16 %v868
      %v901 = vunpack.c.l.b16 %v869
      %v902 = vunpack.c.l.b16 %v870
      %v903 = vunpack.c.l.b16 %v871
      %v904 = vunpack.c.l.b16 %v872
      %v905 = vunpack.c.l.b16 %v873
      %v906 = vunpack.c.l.b16 %v874
      %v907 = vunpack.c.l.b16 %v875
      %v908 = vunpack.c.l.b16 %v876
      %v909 = vunpack.c.l.b16 %v877
      %v910 = vunpack.c.l.b16 %v878
      %v911 = vunpack.c.l.b16 %v879
      %v912 = vunpack.c.l.b16 %v880
      %v913 = vunpack.c.l.b16 %v881
      %v914 = vunpack.c.l.b16 %v882
      %v915 = vunpack.c.l.b16 %v883
      %v916 = vpack.c.b16 %v901, %v900
      %v917 = vpack.c.b16 %v903, %v902
      %v918 = vpack.c.b16 %v905, %v904
      %v919 = vpack.c.b16 %v907, %v906
      %v920 = vpack.c.b16 %v909, %v908
      %v921 = vpack.c.b16 %v911, %v910
      %v922 = vpack.c.b16 %v913, %v912
      %v923 = vpack.c.b16 %v915, %v914
      %932 = vmatprep.subr.bf16.mxu0 0
      %933 = vmatpush1.bf16.msra.mxu0 %v923
      %934 = vmatprep.subr.bf16.mxu0 0
      %935 = vmatpush1.bf16.msra.mxu0 %v922
      %936 = vmatprep.subr.bf16.mxu0 0
      %937 = vmatpush1.bf16.msra.mxu0 %v921
      %938 = vmatprep.subr.bf16.mxu0 0
      %939 = vmatpush1.bf16.msra.mxu0 %v920
      %940 = vmatprep.subr.bf16.mxu0 0
      %941 = vmatpush1.bf16.msra.mxu0 %v919
      %942 = vmatprep.subr.bf16.mxu0 0
      %943 = vmatpush1.bf16.msra.mxu0 %v918
      %944 = vmatprep.subr.bf16.mxu0 0
      %945 = vmatpush1.bf16.msra.mxu0 %v917
      %946 = vmatprep.subr.bf16.mxu0 0
      %947 = vmatpush1.bf16.msra.mxu0 %v916
      %948 = vmatprep.subr.bf16.mxu0 0
      %949 = vmatpush2.bf16.msra.mxu0 0
      %950 = vmatprep.subr.bf16.mxu0 0
      %951 = vmatpush2.bf16.msra.mxu0 0
      %952 = vmatprep.subr.bf16.mxu0 0
      %953 = vmatpush2.bf16.msra.mxu0 0
      %954 = vmatprep.subr.bf16.mxu0 0
      %955 = vmatpush2.bf16.msra.mxu0 0
      %956 = vmatprep.subr.bf16.mxu0 0
      %957 = vmatpush2.bf16.msra.mxu0 0
      %958 = vmatprep.subr.bf16.mxu0 0
      %959 = vmatpush2.bf16.msra.mxu0 0
      %960 = vmatprep.subr.bf16.mxu0 0
      %961 = vmatpush2.bf16.msra.mxu0 0
      %962 = vmatprep.subr.bf16.mxu0 0
      %963 = vmatpush2.bf16.msra.mxu0 0
      %964 = vmatprep.mubr.bf16.mxu0 0
      %965 = vmatmul.mubr.bf16.gmra.mxu0 %v866
      %v966 = vpop.f32.mrf.mxu0
      %v967 = vadd.f32 0.0, %v966
      %v968 = vpop.f32.mrf.mxu0
      %v969 = vpop.f32.mrf.mxu0
      %v970 = vpop.f32.mrf.mxu0
      %971 = vdwg.mxu0
      %v972 = vadd.f32 %v861, %v967
      %v973 = vld [vmem:[%s865 + $0x4] sm:$0xf]
      %s974 = scalar_lea.vmem %s1, 448
      %v975 = vld [vmem:[%s974] sm:$0xf]
      %v976 = vld [vmem:[%s974 + $0x4] sm:$0xf]
      %v977 = vld [vmem:[%s974 + $0x8] sm:$0xf]
      %v978 = vld [vmem:[%s974 + $0xc] sm:$0xf]
      %v979 = vld [vmem:[%s974 + $0x10] sm:$0xf]
      %v980 = vld [vmem:[%s974 + $0x14] sm:$0xf]
      %v981 = vld [vmem:[%s974 + $0x18] sm:$0xf]
      %v982 = vld [vmem:[%s974 + $0x1c] sm:$0xf]
      %v983 = vld [vmem:[%s974 + $0x20] sm:$0xf]
      %v984 = vld [vmem:[%s974 + $0x24] sm:$0xf]
      %v985 = vld [vmem:[%s974 + $0x28] sm:$0xf]
      %v986 = vld [vmem:[%s974 + $0x2c] sm:$0xf]
      %v987 = vld [vmem:[%s974 + $0x30] sm:$0xf]
      %v988 = vld [vmem:[%s974 + $0x34] sm:$0xf]
      %v989 = vld [vmem:[%s974 + $0x38] sm:$0xf]
      %v990 = vld [vmem:[%s974 + $0x3c] sm:$0xf]
      %v1007 = vunpack.c.l.b16 %v975
      %v1008 = vunpack.c.l.b16 %v976
      %v1009 = vunpack.c.l.b16 %v977
      %v1010 = vunpack.c.l.b16 %v978
      %v1011 = vunpack.c.l.b16 %v979
      %v1012 = vunpack.c.l.b16 %v980
      %v1013 = vunpack.c.l.b16 %v981
      %v1014 = vunpack.c.l.b16 %v982
      %v1015 = vunpack.c.l.b16 %v983
      %v1016 = vunpack.c.l.b16 %v984
      %v1017 = vunpack.c.l.b16 %v985
      %v1018 = vunpack.c.l.b16 %v986
      %v1019 = vunpack.c.l.b16 %v987
      %v1020 = vunpack.c.l.b16 %v988
      %v1021 = vunpack.c.l.b16 %v989
      %v1022 = vunpack.c.l.b16 %v990
      %v1023 = vpack.c.b16 %v1008, %v1007
      %v1024 = vpack.c.b16 %v1010, %v1009
      %v1025 = vpack.c.b16 %v1012, %v1011
      %v1026 = vpack.c.b16 %v1014, %v1013
      %v1027 = vpack.c.b16 %v1016, %v1015
      %v1028 = vpack.c.b16 %v1018, %v1017
      %v1029 = vpack.c.b16 %v1020, %v1019
      %v1030 = vpack.c.b16 %v1022, %v1021
      %1039 = vmatprep.subr.bf16.mxu0 0
      %1040 = vmatpush1.bf16.msra.mxu0 %v1030
      %1041 = vmatprep.subr.bf16.mxu0 0
      %1042 = vmatpush1.bf16.msra.mxu0 %v1029
      %1043 = vmatprep.subr.bf16.mxu0 0
      %1044 = vmatpush1.bf16.msra.mxu0 %v1028
      %1045 = vmatprep.subr.bf16.mxu0 0
      %1046 = vmatpush1.bf16.msra.mxu0 %v1027
      %1047 = vmatprep.subr.bf16.mxu0 0
      %1048 = vmatpush1.bf16.msra.mxu0 %v1026
      %1049 = vmatprep.subr.bf16.mxu0 0
      %1050 = vmatpush1.bf16.msra.mxu0 %v1025
      %1051 = vmatprep.subr.bf16.mxu0 0
      %1052 = vmatpush1.bf16.msra.mxu0 %v1024
      %1053 = vmatprep.subr.bf16.mxu0 0
      %1054 = vmatpush1.bf16.msra.mxu0 %v1023
      %1055 = vmatprep.subr.bf16.mxu0 0
      %1056 = vmatpush2.bf16.msra.mxu0 0
      %1057 = vmatprep.subr.bf16.mxu0 0
      %1058 = vmatpush2.bf16.msra.mxu0 0
      %1059 = vmatprep.subr.bf16.mxu0 0
      %1060 = vmatpush2.bf16.msra.mxu0 0
      %1061 = vmatprep.subr.bf16.mxu0 0
      %1062 = vmatpush2.bf16.msra.mxu0 0
      %1063 = vmatprep.subr.bf16.mxu0 0
      %1064 = vmatpush2.bf16.msra.mxu0 0
      %1065 = vmatprep.subr.bf16.mxu0 0
      %1066 = vmatpush2.bf16.msra.mxu0 0
      %1067 = vmatprep.subr.bf16.mxu0 0
      %1068 = vmatpush2.bf16.msra.mxu0 0
      %1069 = vmatprep.subr.bf16.mxu0 0
      %1070 = vmatpush2.bf16.msra.mxu0 0
      %1071 = vmatprep.mubr.bf16.mxu0 0
      %1072 = vmatmul.mubr.bf16.gmra.mxu0 %v973
      %v1073 = vpop.f32.mrf.mxu0
      %v1074 = vadd.f32 0.0, %v1073
      %v1075 = vpop.f32.mrf.mxu0
      %v1076 = vpop.f32.mrf.mxu0
      %v1077 = vpop.f32.mrf.mxu0
      %1078 = vdwg.mxu0
      %v1079 = vadd.f32 %v972, %v1074
      %v1080 = vld [vmem:[%s865] sm:$0xf]
      %v1081 = vld [vmem:[%s865 + $0x10] sm:$0x1]
      %s1082 = scalar_lea.vmem %s1, 512
      %v1083 = vld [vmem:[%s1082] sm:$0xf]
      %v1084 = vld [vmem:[%s1082 + $0x4] sm:$0xf]
      %v1085 = vld [vmem:[%s1082 + $0x8] sm:$0xf]
      %v1086 = vld [vmem:[%s1082 + $0xc] sm:$0xf]
      %v1087 = vld [vmem:[%s1082 + $0x10] sm:$0xf]
      %v1088 = vld [vmem:[%s1082 + $0x14] sm:$0xf]
      %v1089 = vld [vmem:[%s1082 + $0x18] sm:$0xf]
      %v1090 = vld [vmem:[%s1082 + $0x1c] sm:$0xf]
      %v1091 = vld [vmem:[%s1082 + $0x20] sm:$0xf]
      %v1092 = vld [vmem:[%s1082 + $0x24] sm:$0xf]
      %v1093 = vld [vmem:[%s1082 + $0x28] sm:$0xf]
      %v1094 = vld [vmem:[%s1082 + $0x2c] sm:$0xf]
      %v1095 = vld [vmem:[%s1082 + $0x30] sm:$0xf]
      %v1096 = vld [vmem:[%s1082 + $0x34] sm:$0xf]
      %v1097 = vld [vmem:[%s1082 + $0x38] sm:$0xf]
      %v1098 = vld [vmem:[%s1082 + $0x3c] sm:$0xf]
      %v1101 = vunpack.c.l.b16 %v1080
      %v1102 = vunpack.c.l.b16 %v1081
      %v1103 = vpack.c.b16 %v1102, %v1101
      %v1105 = vshrl.u32 %v1103, 16
      %v1107 = vshll.u32 %v1103, 16
      %v1109 = vrot.slane %v1107, 1
      %v1110 = vor.u32 %v1105, %v1109
      %v1128 = vunpack.c.l.b16 %v1083
      %v1129 = vunpack.c.l.b16 %v1084
      %v1130 = vunpack.c.l.b16 %v1085
      %v1131 = vunpack.c.l.b16 %v1086
      %v1132 = vunpack.c.l.b16 %v1087
      %v1133 = vunpack.c.l.b16 %v1088
      %v1134 = vunpack.c.l.b16 %v1089
      %v1135 = vunpack.c.l.b16 %v1090
      %v1136 = vunpack.c.l.b16 %v1091
      %v1137 = vunpack.c.l.b16 %v1092
      %v1138 = vunpack.c.l.b16 %v1093
      %v1139 = vunpack.c.l.b16 %v1094
      %v1140 = vunpack.c.l.b16 %v1095
      %v1141 = vunpack.c.l.b16 %v1096
      %v1142 = vunpack.c.l.b16 %v1097
      %v1143 = vunpack.c.l.b16 %v1098
      %v1144 = vpack.c.b16 %v1129, %v1128
      %v1145 = vpack.c.b16 %v1131, %v1130
      %v1146 = vpack.c.b16 %v1133, %v1132
      %v1147 = vpack.c.b16 %v1135, %v1134
      %v1148 = vpack.c.b16 %v1137, %v1136
      %v1149 = vpack.c.b16 %v1139, %v1138
      %v1150 = vpack.c.b16 %v1141, %v1140
      %v1151 = vpack.c.b16 %v1143, %v1142
      %1160 = vmatprep.subr.bf16.mxu0 0
      %1161 = vmatpush1.bf16.msra.mxu0 %v1151
      %1162 = vmatprep.subr.bf16.mxu0 0
      %1163 = vmatpush1.bf16.msra.mxu0 %v1150
      %1164 = vmatprep.subr.bf16.mxu0 0
      %1165 = vmatpush1.bf16.msra.mxu0 %v1149
      %1166 = vmatprep.subr.bf16.mxu0 0
      %1167 = vmatpush1.bf16.msra.mxu0 %v1148
      %1168 = vmatprep.subr.bf16.mxu0 0
      %1169 = vmatpush1.bf16.msra.mxu0 %v1147
      %1170 = vmatprep.subr.bf16.mxu0 0
      %1171 = vmatpush1.bf16.msra.mxu0 %v1146
      %1172 = vmatprep.subr.bf16.mxu0 0
      %1173 = vmatpush1.bf16.msra.mxu0 %v1145
      %1174 = vmatprep.subr.bf16.mxu0 0
      %1175 = vmatpush1.bf16.msra.mxu0 %v1144
      %1176 = vmatprep.subr.bf16.mxu0 0
      %1177 = vmatpush2.bf16.msra.mxu0 0
      %1178 = vmatprep.subr.bf16.mxu0 0
      %1179 = vmatpush2.bf16.msra.mxu0 0
      %1180 = vmatprep.subr.bf16.mxu0 0
      %1181 = vmatpush2.bf16.msra.mxu0 0
      %1182 = vmatprep.subr.bf16.mxu0 0
      %1183 = vmatpush2.bf16.msra.mxu0 0
      %1184 = vmatprep.subr.bf16.mxu0 0
      %1185 = vmatpush2.bf16.msra.mxu0 0
      %1186 = vmatprep.subr.bf16.mxu0 0
      %1187 = vmatpush2.bf16.msra.mxu0 0
      %1188 = vmatprep.subr.bf16.mxu0 0
      %1189 = vmatpush2.bf16.msra.mxu0 0
      %1190 = vmatprep.subr.bf16.mxu0 0
      %1191 = vmatpush2.bf16.msra.mxu0 0
      %1192 = vmatprep.mubr.bf16.mxu0 0
      %1193 = vmatmul.mubr.bf16.gmra.mxu0 %v1110
      %v1194 = vpop.f32.mrf.mxu0
      %v1195 = vadd.f32 0.0, %v1194
      %v1196 = vpop.f32.mrf.mxu0
      %v1197 = vpop.f32.mrf.mxu0
      %v1198 = vpop.f32.mrf.mxu0
      %1199 = vdwg.mxu0
      %v1200 = vadd.f32 %v1079, %v1195
      %v1201 = vld [vmem:[%s2] sm:$0x1]
      %v1203 = vlaneseq
      %v1204 = vshrl.u32 %v1203, 7
      %v1205 = vsub.s32 0, %v1204
      %v1206 = vrot.slane %v1201, %v1205
      %v1208 = vadd.f32 %v1200, %v1206
      %v1209 = vmax.f32 %v1208, 0.0
      %v1210 = vpack.c.bf16 %v1209, %v1209
      %1211 = vst [vmem:[%s190] sm:$0xf] %v1210
      %p1212 = scmp.lt.s32.totalorder %s18, 1
      %s1213 = scalar_select %p1212, %s18, 1
      %p1214 = scmp.lt.s32.totalorder %s19, 7
      %s1215 = scalar_select %p1214, %s19, 7
      %s1216 = smul.addr %s1213, 8
      %s1217 = sadd.s32 %s1215, %s1216
      %s1218 = smul.addr %s1217, 4
      %s1219 = scalar_lea.vmem %s3, %s1218
      // Predicated region
      $region33: #{bottleneck_forward.4} parent=31 // pred_check
        %p1220 = pneg %p114
      $region34: #{bottleneck_forward.4} parent=31 // pred_check_branch
        %1222 = sbr.rel (%p1220) target = $region36
      $region35: #{bottleneck_forward.4} parent=31 // pred_region
        _
      $region36: #{bottleneck_forward.4} parent=31 // pred_fallthru
        _
    $region32: #{bottleneck_forward.4} parent=5 // pred_fallthru
      _
    %p1223 = scmp.le.s32.totalorder 2, %s9
    // Predicated region
    $region37: #{bottleneck_forward.4} parent=5 // pred_check
      %p1224 = pneg %p1223
    $region38: #{bottleneck_forward.4} parent=5 // pred_check_branch
      %1226 = sbr.rel (%p1224) target = $region40
    $region39: #{bottleneck_forward.4} parent=5 // pred_region
      %s1227 = ssub.s32 %s9, 2
      // Predicated region
      $region41: #{bottleneck_forward.4} parent=39 // pred_check
        %p1228 = pneg %p120
      $region42: #{bottleneck_forward.4} parent=39 // pred_check_branch
        %1230 = sbr.rel (%p1228) target = $region44
      $region43: #{bottleneck_forward.4} parent=39 // pred_region
        %p1231 = scmp.lt.s32.totalorder %s20, 1
        %s1232 = scalar_select %p1231, %s20, 1
        %p1233 = scmp.lt.s32.totalorder %s21, 7
        %s1234 = scalar_select %p1233, %s21, 7
        %s1235 = smul.addr %s1232, 8
        %s1236 = sadd.s32 %s1234, %s1235
        %s1237 = smul.addr %s1236, 4
        %s1238 = scalar_lea.vmem %s3, %s1237
      $region44: #{bottleneck_forward.4} parent=39 // pred_fallthru
        _
    $region40: #{bottleneck_forward.4} parent=5 // pred_fallthru
      _
  $region6: #{bottleneck_forward.4} parent=0 // loop_footer
    %s13 = sadd.s32 1, %s9
  $region7: #{bottleneck_forward.4} parent=0 // loop_footer_branch
    %8 = sbr.rel target = $region3
  $region8: #{bottleneck_forward.4} parent=0 // loop_exit
    _

// kernel: bottleneck_forward.5
$region0: #{bottleneck_forward.5}
  #allocation0 [shape = 'u32[]', space=smem, size = 0x4, offset = 0x4, fixed_abs, tag = 'smem constant byte address 0x4 - core index']
  #allocation1 [shape = 'u32[144,128]{1,0:T(1,128)}', space=vmem, size = 0x12000, scoped, tag = 'internal scratch']
  %s0 = inlined_call_operand.vmem [shape: bf16[128,128], index: 0, kind: input, shape index: {}]
  %s1 = inlined_call_operand.vmem [shape: bf16[128,128], index: 1, kind: input, shape index: {}]
  %s2 = inlined_call_operand.vmem [shape: bf16[128,128], index: 2, kind: input, shape index: {}]
  %s3 = inlined_call_operand.vmem [shape: bf16[128,128], index: 3, kind: input, shape index: {}]
  %s4 = inlined_call_operand.vmem [shape: f32[1,128], index: 4, kind: input, shape index: {}]
  %s5 = inlined_call_operand.hbm [shape: f32[128,128], index: 5, kind: output, shape index: {}]
  %s6 = sld [smem:[#allocation0]]
  $region30: #{bottleneck_forward.5} parent=0
    _
  %s8 = ssub.s32 1, %s6
  %s9 = scalar_select 0, %s8, %s6
  $region1: #{bottleneck_forward.5} parent=0
    #allocation2 [shape = 'u8[65536]{0}', space=vmem, size = 0x10000, scoped, tag = 'output window, operand 0, single buffered']
    #allocation3 [shape = 's32[1]{0}', space=sflag, size = 0x4, scoped, tag = 'scoped memory for bottleneck_forward.5']
    %10 = vsyncpa [#allocation3], 0
    // Predicated region
    $region2: #{bottleneck_forward.5} parent=1 // pred_check
      _
    $region3: #{bottleneck_forward.5} parent=1 // pred_check_branch
      %12 = sbr.rel (0) target = $region5
    $region4: #{bottleneck_forward.5} parent=1 // pred_region
      _
    $region5: #{bottleneck_forward.5} parent=1 // pred_fallthru
      _
    // Predicated region
    $region6: #{bottleneck_forward.5} parent=1 // pred_check
      _
    $region7: #{bottleneck_forward.5} parent=1 // pred_check_branch
      %14 = sbr.rel (0) target = $region9
    $region8: #{bottleneck_forward.5} parent=1 // pred_region
      _
    $region9: #{bottleneck_forward.5} parent=1 // pred_fallthru
      _
    // Predicated region
    $region10: #{bottleneck_forward.5} parent=1 // pred_check
      _
    $region11: #{bottleneck_forward.5} parent=1 // pred_check_branch
      %16 = sbr.rel (0) target = $region13
    $region12: #{bottleneck_forward.5} parent=1 // pred_region
      _
    $region13: #{bottleneck_forward.5} parent=1 // pred_fallthru
      _
    // Predicated region
    $region14: #{bottleneck_forward.5} parent=1 // pred_check
      _
    $region15: #{bottleneck_forward.5} parent=1 // pred_check_branch
      %18 = sbr.rel (0) target = $region17
    $region16: #{bottleneck_forward.5} parent=1 // pred_region
      _
    $region17: #{bottleneck_forward.5} parent=1 // pred_fallthru
      _
    // Predicated region
    $region18: #{bottleneck_forward.5} parent=1 // pred_check
      _
    $region19: #{bottleneck_forward.5} parent=1 // pred_check_branch
      %20 = sbr.rel (0) target = $region21
    $region20: #{bottleneck_forward.5} parent=1 // pred_region
      _
    $region21: #{bottleneck_forward.5} parent=1 // pred_fallthru
      _
    %v22 = vld [vmem:[%s0] sm:$0xf]
    %v23 = vld [vmem:[%s0 + $0x4] sm:$0xf]
    %v24 = vld [vmem:[%s0 + $0x8] sm:$0xf]
    %v25 = vld [vmem:[%s0 + $0xc] sm:$0xf]
    %v26 = vld [vmem:[%s0 + $0x10] sm:$0xf]
    %v27 = vld [vmem:[%s0 + $0x14] sm:$0xf]
    %v28 = vld [vmem:[%s0 + $0x18] sm:$0xf]
    %v29 = vld [vmem:[%s0 + $0x1c] sm:$0xf]
    %v30 = vld [vmem:[%s0 + $0x20] sm:$0xf]
    %v31 = vld [vmem:[%s0 + $0x24] sm:$0xf]
    %v32 = vld [vmem:[%s0 + $0x28] sm:$0xf]
    %v33 = vld [vmem:[%s0 + $0x2c] sm:$0xf]
    %v34 = vld [vmem:[%s0 + $0x30] sm:$0xf]
    %v35 = vld [vmem:[%s0 + $0x34] sm:$0xf]
    %v36 = vld [vmem:[%s0 + $0x38] sm:$0xf]
    %v37 = vld [vmem:[%s0 + $0x3c] sm:$0xf]
    %v38 = vld [vmem:[%s1] sm:$0xf]
    %v39 = vld [vmem:[%s1 + $0x4] sm:$0xf]
    %v40 = vld [vmem:[%s1 + $0x8] sm:$0xf]
    %v41 = vld [vmem:[%s1 + $0xc] sm:$0xf]
    %v42 = vld [vmem:[%s1 + $0x10] sm:$0xf]
    %v43 = vld [vmem:[%s1 + $0x14] sm:$0xf]
    %v44 = vld [vmem:[%s1 + $0x18] sm:$0xf]
    %v45 = vld [vmem:[%s1 + $0x1c] sm:$0xf]
    %v46 = vld [vmem:[%s1 + $0x20] sm:$0xf]
    %v47 = vld [vmem:[%s1 + $0x24] sm:$0xf]
    %v48 = vld [vmem:[%s1 + $0x28] sm:$0xf]
    %v49 = vld [vmem:[%s1 + $0x2c] sm:$0xf]
    %v50 = vld [vmem:[%s1 + $0x30] sm:$0xf]
    %v51 = vld [vmem:[%s1 + $0x34] sm:$0xf]
    %v52 = vld [vmem:[%s1 + $0x38] sm:$0xf]
    %v53 = vld [vmem:[%s1 + $0x3c] sm:$0xf]
    %v54 = vld [vmem:[%s2] sm:$0xf]
    %v55 = vld [vmem:[%s2 + $0x4] sm:$0xf]
    %v56 = vld [vmem:[%s2 + $0x8] sm:$0xf]
    %v57 = vld [vmem:[%s2 + $0xc] sm:$0xf]
    %v58 = vld [vmem:[%s2 + $0x10] sm:$0xf]
    %v59 = vld [vmem:[%s2 + $0x14] sm:$0xf]
    %v60 = vld [vmem:[%s2 + $0x18] sm:$0xf]
    %v61 = vld [vmem:[%s2 + $0x1c] sm:$0xf]
    %v62 = vld [vmem:[%s2 + $0x20] sm:$0xf]
    %v63 = vld [vmem:[%s2 + $0x24] sm:$0xf]
    %v64 = vld [vmem:[%s2 + $0x28] sm:$0xf]
    %v65 = vld [vmem:[%s2 + $0x2c] sm:$0xf]
    %v66 = vld [vmem:[%s2 + $0x30] sm:$0xf]
    %v67 = vld [vmem:[%s2 + $0x34] sm:$0xf]
    %v68 = vld [vmem:[%s2 + $0x38] sm:$0xf]
    %v69 = vld [vmem:[%s2 + $0x3c] sm:$0xf]
    %v70 = vld [vmem:[%s3] sm:$0xf]
    %v71 = vld [vmem:[%s3 + $0x4] sm:$0xf]
    %v72 = vld [vmem:[%s3 + $0x8] sm:$0xf]
    %v73 = vld [vmem:[%s3 + $0xc] sm:$0xf]
    %v74 = vld [vmem:[%s3 + $0x10] sm:$0xf]
    %v75 = vld [vmem:[%s3 + $0x14] sm:$0xf]
    %v76 = vld [vmem:[%s3 + $0x18] sm:$0xf]
    %v77 = vld [vmem:[%s3 + $0x1c] sm:$0xf]
    %v78 = vld [vmem:[%s3 + $0x20] sm:$0xf]
    %v79 = vld [vmem:[%s3 + $0x24] sm:$0xf]
    %v80 = vld [vmem:[%s3 + $0x28] sm:$0xf]
    %v81 = vld [vmem:[%s3 + $0x2c] sm:$0xf]
    %v82 = vld [vmem:[%s3 + $0x30] sm:$0xf]
    %v83 = vld [vmem:[%s3 + $0x34] sm:$0xf]
    %v84 = vld [vmem:[%s3 + $0x38] sm:$0xf]
    %v85 = vld [vmem:[%s3 + $0x3c] sm:$0xf]
    %v102 = vunpack.c.l.b16 %v54
    %v103 = vunpack.c.l.b16 %v55
    %v104 = vunpack.c.l.b16 %v56
    %v105 = vunpack.c.l.b16 %v57
    %v106 = vunpack.c.l.b16 %v58
    %v107 = vunpack.c.l.b16 %v59
    %v108 = vunpack.c.l.b16 %v60
    %v109 = vunpack.c.l.b16 %v61
    %v110 = vunpack.c.l.b16 %v62
    %v111 = vunpack.c.l.b16 %v63
    %v112 = vunpack.c.l.b16 %v64
    %v113 = vunpack.c.l.b16 %v65
    %v114 = vunpack.c.l.b16 %v66
    %v115 = vunpack.c.l.b16 %v67
    %v116 = vunpack.c.l.b16 %v68
    %v117 = vunpack.c.l.b16 %v69
    %v118 = vpack.c.b16 %v103, %v102
    %v119 = vpack.c.b16 %v105, %v104
    %v120 = vpack.c.b16 %v107, %v106
    %v121 = vpack.c.b16 %v109, %v108
    %v122 = vpack.c.b16 %v111, %v110
    %v123 = vpack.c.b16 %v113, %v112
    %v124 = vpack.c.b16 %v115, %v114
    %v125 = vpack.c.b16 %v117, %v116
    %v150 = vunpack.c.l.b16 %v70
    %v151 = vunpack.c.l.b16 %v71
    %v152 = vunpack.c.l.b16 %v72
    %v153 = vunpack.c.l.b16 %v73
    %v154 = vunpack.c.l.b16 %v74
    %v155 = vunpack.c.l.b16 %v75
    %v156 = vunpack.c.l.b16 %v76
    %v157 = vunpack.c.l.b16 %v77
    %v158 = vunpack.c.l.b16 %v78
    %v159 = vunpack.c.l.b16 %v79
    %v160 = vunpack.c.l.b16 %v80
    %v161 = vunpack.c.l.b16 %v81
    %v162 = vunpack.c.l.b16 %v82
    %v163 = vunpack.c.l.b16 %v83
    %v164 = vunpack.c.l.b16 %v84
    %v165 = vunpack.c.l.b16 %v85
    %v166 = vpack.c.b16 %v151, %v150
    %v167 = vpack.c.b16 %v153, %v152
    %v168 = vpack.c.b16 %v155, %v154
    %v169 = vpack.c.b16 %v157, %v156
    %v170 = vpack.c.b16 %v159, %v158
    %v171 = vpack.c.b16 %v161, %v160
    %v172 = vpack.c.b16 %v163, %v162
    %v173 = vpack.c.b16 %v165, %v164
    %182 = vmatprep.subr.bf16.mxu0 0
    %183 = vmatpush1.bf16.msra.mxu0 %v173
    %184 = vmatprep.subr.bf16.mxu0 0
    %185 = vmatpush1.bf16.msra.mxu0 %v172
    %186 = vmatprep.subr.bf16.mxu0 0
    %187 = vmatpush1.bf16.msra.mxu0 %v171
    %188 = vmatprep.subr.bf16.mxu0 0
    %189 = vmatpush1.bf16.msra.mxu0 %v170
    %190 = vmatprep.subr.bf16.mxu0 0
    %191 = vmatpush1.bf16.msra.mxu0 %v169
    %192 = vmatprep.subr.bf16.mxu0 0
    %193 = vmatpush1.bf16.msra.mxu0 %v168
    %194 = vmatprep.subr.bf16.mxu0 0
    %195 = vmatpush1.bf16.msra.mxu0 %v167
    %196 = vmatprep.subr.bf16.mxu0 0
    %197 = vmatpush1.bf16.msra.mxu0 %v166
    %198 = vmatprep.subr.bf16.mxu0 0
    %199 = vmatpush2.bf16.msra.mxu0 0
    %200 = vmatprep.subr.bf16.mxu0 0
    %201 = vmatpush2.bf16.msra.mxu0 0
    %202 = vmatprep.subr.bf16.mxu0 0
    %203 = vmatpush2.bf16.msra.mxu0 0
    %204 = vmatprep.subr.bf16.mxu0 0
    %205 = vmatpush2.bf16.msra.mxu0 0
    %206 = vmatprep.subr.bf16.mxu0 0
    %207 = vmatpush2.bf16.msra.mxu0 0
    %208 = vmatprep.subr.bf16.mxu0 0
    %209 = vmatpush2.bf16.msra.mxu0 0
    %210 = vmatprep.subr.bf16.mxu0 0
    %211 = vmatpush2.bf16.msra.mxu0 0
    %212 = vmatprep.subr.bf16.mxu0 0
    %213 = vmatpush2.bf16.msra.mxu0 0
    %214 = vmatprep.mubr.bf16.mxu0 0
    %215 = vmatmul.mubr.bf16.gmra.mxu0 %v118
    %v216 = vpop.f32.mrf.mxu0
    %v217 = vadd.f32 0.0, %v216
    %v218 = vpop.f32.mrf.mxu0
    %v219 = vpop.f32.mrf.mxu0
    %v220 = vadd.f32 0.0, %v219
    %v221 = vpop.f32.mrf.mxu0
    %222 = vmatprep.mubr.bf16.mxu0 0
    %223 = vmatmul.mubr.bf16.gmra.mxu0 %v119
    %v224 = vpop.f32.mrf.mxu0
    %v225 = vadd.f32 0.0, %v224
    %v226 = vpop.f32.mrf.mxu0
    %v227 = vpop.f32.mrf.mxu0
    %v228 = vadd.f32 0.0, %v227
    %v229 = vpop.f32.mrf.mxu0
    %230 = vmatprep.mubr.bf16.mxu0 0
    %231 = vmatmul.mubr.bf16.gmra.mxu0 %v120
    %v232 = vpop.f32.mrf.mxu0
    %v233 = vadd.f32 0.0, %v232
    %v234 = vpop.f32.mrf.mxu0
    %v235 = vpop.f32.mrf.mxu0
    %v236 = vadd.f32 0.0, %v235
    %v237 = vpop.f32.mrf.mxu0
    %238 = vmatprep.mubr.bf16.mxu0 0
    %239 = vmatmul.mubr.bf16.gmra.mxu0 %v121
    %v240 = vpop.f32.mrf.mxu0
    %v241 = vadd.f32 0.0, %v240
    %v242 = vpop.f32.mrf.mxu0
    %v243 = vpop.f32.mrf.mxu0
    %v244 = vadd.f32 0.0, %v243
    %v245 = vpop.f32.mrf.mxu0
    %246 = vmatprep.mubr.bf16.mxu0 0
    %247 = vmatmul.mubr.bf16.gmra.mxu0 %v122
    %v248 = vpop.f32.mrf.mxu0
    %v249 = vadd.f32 0.0, %v248
    %v250 = vpop.f32.mrf.mxu0
    %v251 = vpop.f32.mrf.mxu0
    %v252 = vadd.f32 0.0, %v251
    %v253 = vpop.f32.mrf.mxu0
    %254 = vmatprep.mubr.bf16.mxu0 0
    %255 = vmatmul.mubr.bf16.gmra.mxu0 %v123
    %v256 = vpop.f32.mrf.mxu0
    %v257 = vadd.f32 0.0, %v256
    %v258 = vpop.f32.mrf.mxu0
    %v259 = vpop.f32.mrf.mxu0
    %v260 = vadd.f32 0.0, %v259
    %v261 = vpop.f32.mrf.mxu0
    %262 = vmatprep.mubr.bf16.mxu0 0
    %263 = vmatmul.mubr.bf16.gmra.mxu0 %v124
    %v264 = vpop.f32.mrf.mxu0
    %v265 = vadd.f32 0.0, %v264
    %v266 = vpop.f32.mrf.mxu0
    %v267 = vpop.f32.mrf.mxu0
    %v268 = vadd.f32 0.0, %v267
    %v269 = vpop.f32.mrf.mxu0
    %270 = vmatprep.mubr.bf16.mxu0 0
    %271 = vmatmul.mubr.bf16.gmra.mxu0 %v125
    %v272 = vpop.f32.mrf.mxu0
    %v273 = vadd.f32 0.0, %v272
    %v274 = vpop.f32.mrf.mxu0
    %v275 = vpop.f32.mrf.mxu0
    %v276 = vadd.f32 0.0, %v275
    %v277 = vpop.f32.mrf.mxu0
    %278 = vdwg.mxu0
    %v295 = vunpack.c.l.b16 %v22
    %v296 = vunpack.c.l.b16 %v23
    %v297 = vunpack.c.l.b16 %v24
    %v298 = vunpack.c.l.b16 %v25
    %v299 = vunpack.c.l.b16 %v26
    %v300 = vunpack.c.l.b16 %v27
    %v301 = vunpack.c.l.b16 %v28
    %v302 = vunpack.c.l.b16 %v29
    %v303 = vunpack.c.l.b16 %v30
    %v304 = vunpack.c.l.b16 %v31
    %v305 = vunpack.c.l.b16 %v32
    %v306 = vunpack.c.l.b16 %v33
    %v307 = vunpack.c.l.b16 %v34
    %v308 = vunpack.c.l.b16 %v35
    %v309 = vunpack.c.l.b16 %v36
    %v310 = vunpack.c.l.b16 %v37
    %v311 = vpack.c.b16 %v296, %v295
    %v312 = vpack.c.b16 %v298, %v297
    %v313 = vpack.c.b16 %v300, %v299
    %v314 = vpack.c.b16 %v302, %v301
    %v315 = vpack.c.b16 %v304, %v303
    %v316 = vpack.c.b16 %v306, %v305
    %v317 = vpack.c.b16 %v308, %v307
    %v318 = vpack.c.b16 %v310, %v309
    %v343 = vunpack.c.l.b16 %v38
    %v344 = vunpack.c.l.b16 %v39
    %v345 = vunpack.c.l.b16 %v40
    %v346 = vunpack.c.l.b16 %v41
    %v347 = vunpack.c.l.b16 %v42
    %v348 = vunpack.c.l.b16 %v43
    %v349 = vunpack.c.l.b16 %v44
    %v350 = vunpack.c.l.b16 %v45
    %v351 = vunpack.c.l.b16 %v46
    %v352 = vunpack.c.l.b16 %v47
    %v353 = vunpack.c.l.b16 %v48
    %v354 = vunpack.c.l.b16 %v49
    %v355 = vunpack.c.l.b16 %v50
    %v356 = vunpack.c.l.b16 %v51
    %v357 = vunpack.c.l.b16 %v52
    %v358 = vunpack.c.l.b16 %v53
    %v359 = vpack.c.b16 %v344, %v343
    %v360 = vpack.c.b16 %v346, %v345
    %v361 = vpack.c.b16 %v348, %v347
    %v362 = vpack.c.b16 %v350, %v349
    %v363 = vpack.c.b16 %v352, %v351
    %v364 = vpack.c.b16 %v354, %v353
    %v365 = vpack.c.b16 %v356, %v355
    %v366 = vpack.c.b16 %v358, %v357
    %375 = vmatprep.subr.bf16.mxu0 0
    %376 = vmatpush1.bf16.msra.mxu0 %v366
    %377 = vmatprep.subr.bf16.mxu0 0
    %378 = vmatpush1.bf16.msra.mxu0 %v365
    %379 = vmatprep.subr.bf16.mxu0 0
    %380 = vmatpush1.bf16.msra.mxu0 %v364
    %381 = vmatprep.subr.bf16.mxu0 0
    %382 = vmatpush1.bf16.msra.mxu0 %v363
    %383 = vmatprep.subr.bf16.mxu0 0
    %384 = vmatpush1.bf16.msra.mxu0 %v362
    %385 = vmatprep.subr.bf16.mxu0 0
    %386 = vmatpush1.bf16.msra.mxu0 %v361
    %387 = vmatprep.subr.bf16.mxu0 0
    %388 = vmatpush1.bf16.msra.mxu0 %v360
    %389 = vmatprep.subr.bf16.mxu0 0
    %390 = vmatpush1.bf16.msra.mxu0 %v359
    %391 = vmatprep.subr.bf16.mxu0 0
    %392 = vmatpush2.bf16.msra.mxu0 0
    %393 = vmatprep.subr.bf16.mxu0 0
    %394 = vmatpush2.bf16.msra.mxu0 0
    %395 = vmatprep.subr.bf16.mxu0 0
    %396 = vmatpush2.bf16.msra.mxu0 0
    %397 = vmatprep.subr.bf16.mxu0 0
    %398 = vmatpush2.bf16.msra.mxu0 0
    %399 = vmatprep.subr.bf16.mxu0 0
    %400 = vmatpush2.bf16.msra.mxu0 0
    %401 = vmatprep.subr.bf16.mxu0 0
    %402 = vmatpush2.bf16.msra.mxu0 0
    %403 = vmatprep.subr.bf16.mxu0 0
    %404 = vmatpush2.bf16.msra.mxu0 0
    %405 = vmatprep.subr.bf16.mxu0 0
    %406 = vmatpush2.bf16.msra.mxu0 0
    %407 = vmatprep.mubr.bf16.mxu0 0
    %408 = vmatmul.mubr.bf16.gmra.mxu0 %v311
    %v409 = vpop.f32.mrf.mxu0
    %v410 = vadd.f32 %v217, %v409
    %v411 = vpop.f32.mrf.mxu0
    %v412 = vpop.f32.mrf.mxu0
    %v413 = vadd.f32 %v220, %v412
    %v414 = vpop.f32.mrf.mxu0
    %415 = vmatprep.mubr.bf16.mxu0 0
    %416 = vmatmul.mubr.bf16.gmra.mxu0 %v312
    %v417 = vpop.f32.mrf.mxu0
    %v418 = vadd.f32 %v225, %v417
    %v419 = vpop.f32.mrf.mxu0
    %v420 = vpop.f32.mrf.mxu0
    %v421 = vadd.f32 %v228, %v420
    %v422 = vpop.f32.mrf.mxu0
    %423 = vmatprep.mubr.bf16.mxu0 0
    %424 = vmatmul.mubr.bf16.gmra.mxu0 %v313
    %v425 = vpop.f32.mrf.mxu0
    %v426 = vadd.f32 %v233, %v425
    %v427 = vpop.f32.mrf.mxu0
    %v428 = vpop.f32.mrf.mxu0
    %v429 = vadd.f32 %v236, %v428
    %v430 = vpop.f32.mrf.mxu0
    %431 = vmatprep.mubr.bf16.mxu0 0
    %432 = vmatmul.mubr.bf16.gmra.mxu0 %v314
    %v433 = vpop.f32.mrf.mxu0
    %v434 = vadd.f32 %v241, %v433
    %v435 = vpop.f32.mrf.mxu0
    %v436 = vpop.f32.mrf.mxu0
    %v437 = vadd.f32 %v244, %v436
    %v438 = vpop.f32.mrf.mxu0
    %439 = vmatprep.mubr.bf16.mxu0 0
    %440 = vmatmul.mubr.bf16.gmra.mxu0 %v315
    %v441 = vpop.f32.mrf.mxu0
    %v442 = vadd.f32 %v249, %v441
    %v443 = vpop.f32.mrf.mxu0
    %v444 = vpop.f32.mrf.mxu0
    %v445 = vadd.f32 %v252, %v444
    %v446 = vpop.f32.mrf.mxu0
    %447 = vmatprep.mubr.bf16.mxu0 0
    %448 = vmatmul.mubr.bf16.gmra.mxu0 %v316
    %v449 = vpop.f32.mrf.mxu0
    %v450 = vadd.f32 %v257, %v449
    %v451 = vpop.f32.mrf.mxu0
    %v452 = vpop.f32.mrf.mxu0
    %v453 = vadd.f32 %v260, %v452
    %v454 = vpop.f32.mrf.mxu0
    %455 = vmatprep.mubr.bf16.mxu0 0
    %456 = vmatmul.mubr.bf16.gmra.mxu0 %v317
    %v457 = vpop.f32.mrf.mxu0
    %v458 = vadd.f32 %v265, %v457
    %v459 = vpop.f32.mrf.mxu0
    %v460 = vpop.f32.mrf.mxu0
    %v461 = vadd.f32 %v268, %v460
    %v462 = vpop.f32.mrf.mxu0
    %463 = vmatprep.mubr.bf16.mxu0 0
    %464 = vmatmul.mubr.bf16.gmra.mxu0 %v318
    %v465 = vpop.f32.mrf.mxu0
    %v466 = vadd.f32 %v273, %v465
    %v467 = vpop.f32.mrf.mxu0
    %v468 = vpop.f32.mrf.mxu0
    %v469 = vadd.f32 %v276, %v468
    %v470 = vpop.f32.mrf.mxu0
    %471 = vdwg.mxu0
    %v472 = vld [vmem:[%s4] sm:$0x1]
    %v474 = vlaneseq
    %v475 = vshrl.u32 %v474, 7
    %v476 = vsub.s32 0, %v475
    %v477 = vrot.slane %v472, %v476
    %v479 = vadd.f32 %v410, %v477
    %v480 = vadd.f32 %v413, %v477
    %v481 = vadd.f32 %v418, %v477
    %v482 = vadd.f32 %v421, %v477
    %v483 = vadd.f32 %v426, %v477
    %v484 = vadd.f32 %v429, %v477
    %v485 = vadd.f32 %v434, %v477
    %v486 = vadd.f32 %v437, %v477
    %v487 = vadd.f32 %v442, %v477
    %v488 = vadd.f32 %v445, %v477
    %v489 = vadd.f32 %v450, %v477
    %v490 = vadd.f32 %v453, %v477
    %v491 = vadd.f32 %v458, %v477
    %v492 = vadd.f32 %v461, %v477
    %v493 = vadd.f32 %v466, %v477
    %v494 = vadd.f32 %v469, %v477
    %v495 = vmax.f32 %v479, 0.0
    %v496 = vmax.f32 %v480, 0.0
    %v497 = vmax.f32 %v481, 0.0
    %v498 = vmax.f32 %v482, 0.0
    %v499 = vmax.f32 %v483, 0.0
    %v500 = vmax.f32 %v484, 0.0
    %v501 = vmax.f32 %v485, 0.0
    %v502 = vmax.f32 %v486, 0.0
    %v503 = vmax.f32 %v487, 0.0
    %v504 = vmax.f32 %v488, 0.0
    %v505 = vmax.f32 %v489, 0.0
    %v506 = vmax.f32 %v490, 0.0
    %v507 = vmax.f32 %v491, 0.0
    %v508 = vmax.f32 %v492, 0.0
    %v509 = vmax.f32 %v493, 0.0
    %v510 = vmax.f32 %v494, 0.0
    %511 = vst [vmem:[#allocation2] sm:$0xff] %v495
    %512 = vst [vmem:[#allocation2 + $0x8] sm:$0xff] %v496
    %513 = vst [vmem:[#allocation2 + $0x10] sm:$0xff] %v497
    %514 = vst [vmem:[#allocation2 + $0x18] sm:$0xff] %v498
    %515 = vst [vmem:[#allocation2 + $0x20] sm:$0xff] %v499
    %516 = vst [vmem:[#allocation2 + $0x28] sm:$0xff] %v500
    %517 = vst [vmem:[#allocation2 + $0x30] sm:$0xff] %v501
    %518 = vst [vmem:[#allocation2 + $0x38] sm:$0xff] %v502
    %519 = vst [vmem:[#allocation2 + $0x40] sm:$0xff] %v503
    %520 = vst [vmem:[#allocation2 + $0x48] sm:$0xff] %v504
    %521 = vst [vmem:[#allocation2 + $0x50] sm:$0xff] %v505
    %522 = vst [vmem:[#allocation2 + $0x58] sm:$0xff] %v506
    %523 = vst [vmem:[#allocation2 + $0x60] sm:$0xff] %v507
    %524 = vst [vmem:[#allocation2 + $0x68] sm:$0xff] %v508
    %525 = vst [vmem:[#allocation2 + $0x70] sm:$0xff] %v509
    %526 = vst [vmem:[#allocation2 + $0x78] sm:$0xff] %v510
    // Predicated region
    $region22: #{bottleneck_forward.5} parent=1 // pred_check
      _
    $region23: #{bottleneck_forward.5} parent=1 // pred_check_branch
      %528 = sbr.rel (0) target = $region25
    $region24: #{bottleneck_forward.5} parent=1 // pred_region
      %s530 = ssub.s32 2048, 2048
      %531 = vsyncadd [#allocation3], %s530
      %s532 = sshll.u32 [#allocation2], 4
      %s533 = int_to_ptr.vmem [resolvable:$true] %s532
      %538 = dma.vmem_to_hbm [thread:$0]  %s533, 2048, %s5, [#allocation3], 128, 128, 8
    $region25: #{bottleneck_forward.5} parent=1 // pred_fallthru
      _
    // Predicated region
    $region26: #{bottleneck_forward.5} parent=1 // pred_check
      _
    $region27: #{bottleneck_forward.5} parent=1 // pred_check_branch
      %540 = sbr.rel (0) target = $region29
    $region28: #{bottleneck_forward.5} parent=1 // pred_region
      %541 = dma.done [#allocation3], 2048
    $region29: #{bottleneck_forward.5} parent=1 // pred_fallthru
      _
    %542 = vsyncpa [#allocation3], 1

</llo_original>
